<compile_context>
chip_gen: v5e
topology: v5e:2x2
jax: 0.10.0
libtpu: 0.0.40
codegen_flags: <defaults>
</compile_context>

<pallas_src>
import functools

import jax
import jax.numpy as jnp
from jax.experimental import pallas as pl
from jax.experimental.pallas import tpu as pltpu


def _round_up(v, m):
    return (v + m - 1) // m * m


def side_layer_forward(x, params, cfg, *, batch_tile=None):
    """Fused SideLayer forward (eval mode). Returns (x1, x2, x3)."""
    n, c_in, length = x.shape
    c_out = cfg["out_channels"]
    hidden = cfg["linear_hidden_dim"]
    out_dim = cfg["linear_out_dim"]
    ks = tuple(cfg["comb_kernel_sizes"])
    ko = cfg["comb_out_kernel_size"]
    n_br = len(ks)
    assert cfg["linear_in_dim"] == c_out * length
    # TODO(synk): the F.interpolate resize path (C*L != linear_in_dim) is not
    # implemented; shapes are chosen so it is never triggered.

    if batch_tile is None:
        max_bt = max(1, 1024 // length)                 # keep lanes <= ~1024
        cands = [d for d in range(1, n + 1) if n % d == 0 and d <= max_bt]
        multi = [d for d in cands if n // d >= 2]       # grid >= 2 for v7x megacore
        batch_tile = max(multi) if multi else max(cands)
    assert n % batch_tile == 0
    lanes = batch_tile * length
    grid_n = n // batch_tile

    # ---- im2col plan: one shared, 8-aligned scratch --------------------------
    p_in = _round_up(c_in, 8)                           # sublane stride per x tap
    lefts = [(k - 1) // 2 for k in ks]
    left_o = (ko - 1) // 2
    o_shifts = [t - left_o for t in range(ko)]
    s_min = min([-left_o] + [-l for l in lefts])
    s_max = max([ko - 1 - left_o] + [k - 1 - l for k, l in zip(ks, lefts)])
    x_shifts = list(range(s_min, s_max + 1))            # every conv's taps form a
    x_off = {s: i * p_in for i, s in enumerate(x_shifts)}  # contiguous row range
    br_base = len(x_shifts) * p_in                      # branch-output tap region
    br_rows = ko * n_br * c_out
    stack_rows = _round_up(br_base + br_rows, 8)
    assert max(abs(s_min), abs(s_max)) < length         # roll+mask shift validity

    # ---- weight packing (zero columns over the sublane padding) --------------
    def pack_x_taps(w_koc):                  # (k, c_out, c_in) -> (c_out, k*p_in)
        k = w_koc.shape[0]
        wpad = jnp.pad(w_koc, ((0, 0), (0, 0), (0, p_in - c_in)))
        return jnp.transpose(wpad, (1, 0, 2)).reshape(c_out, k * p_in)

    wb_packed = [pack_x_taps(w) for w in params["wb"]]
    wox = pack_x_taps(params["wo_full"][:, :, :c_in])   # out-conv, x channels
    wobr = jnp.concatenate(                              # out-conv, branch channels
        [jnp.transpose(
            params["wo_full"][:, :, c_in + bi * c_out:c_in + (bi + 1) * c_out],
            (1, 0, 2)).reshape(c_out, ko * c_out)
         for bi in range(n_br)],
        axis=1)                                          # col (bi*ko+t)*c_out + oc

    # ---- fused kernel ---------------------------------------------------------
    def kernel(*refs):
        idx = 0
        x_ref = refs[idx]; idx += 1                      # (batch_tile, c_in, L)
        wbs, bbs = [], []
        for _ in range(n_br):
            wbs.append(refs[idx]); bbs.append(refs[idx + 1]); idx += 2
        wox_ref = refs[idx]; idx += 1                    # (c_out, ko*p_in)
        wobr_ref = refs[idx]; idx += 1                   # (c_out, ko*n_br*c_out)
        bo_ref = refs[idx]; idx += 1                     # (c_out, 1)
        w0_ref = refs[idx]; idx += 1                     # (c_out*L, hidden)
        b0_ref = refs[idx]; idx += 1                     # (1, hidden)
        w1_ref = refs[idx]; idx += 1                     # (hidden, out_dim)
        b1_ref = refs[idx]; idx += 1                     # (1, out_dim)
        x1_ref = refs[idx]; idx += 1                     # (1, batch_tile, c_out*L)
        x2_ref = refs[idx]; idx += 1                     # (1, batch_tile, hidden)
        x3_ref = refs[idx]; idx += 1                     # (1, batch_tile, out_dim)
        stk_ref = refs[idx]; idx += 1                    # (stack_rows, lanes)

        # Zero the sublane-padding rows of the x-tap regions so the zero weight
        # columns never multiply uninitialized VMEM.
        if c_in < p_in:
            zpad = jnp.zeros((p_in - c_in, lanes), jnp.float32)
            for s in x_shifts:
                stk_ref[x_off[s] + c_in:x_off[s] + p_in, :] = zpad

        # Fold (batch_tile, c_in, L) -> (c_in, batch_tile*L) straight into the
        # shift-0 tap region: batch segment b lives on lanes [b*L, (b+1)*L).
        r0 = x_off[0]
        for b in range(batch_tile):
            stk_ref[r0:r0 + c_in, b * length:(b + 1) * length] = x_ref[b]
        xv = stk_ref[r0:r0 + c_in, :]                    # (c_in, lanes)

        # Hoisted per-shift masks (one one-sided compare each, shared by the x
        # taps and the branch-output taps of the same shift).
        pos = jax.lax.broadcasted_iota(jnp.int32, (1, lanes), 1) % length
        masks = {s: (pos < length - s) if s > 0 else (pos >= -s)
                 for s in x_shifts if s != 0}

        def shifted(v, s):
            # out[:, b*L+p] = v[:, b*L+p+s] if 0 <= p+s < L else 0  ('same' pad)
            if s == 0:
                return v
            return jnp.where(masks[s],
                             pltpu.roll(v, shift=(-s) % lanes, axis=1), 0.0)

        # Shared shifted-x taps: compute once, store once.
        for s in x_shifts:
            if s != 0:
                stk_ref[x_off[s]:x_off[s] + c_in, :] = shifted(xv, s)

        # Branch convs: one im2col matmul over a contiguous tap range each.
        for bi, (k, left) in enumerate(zip(ks, lefts)):
            row = x_off[-left]
            z = jnp.dot(wbs[bi][...], stk_ref[row:row + k * p_in, :],
                        preferred_element_type=jnp.float32)
            br = jnp.maximum(z + bbs[bi][...], 0.0)      # (c_out, lanes)
            # dropout between the concat and the out-conv is identity at eval
            for t, s in enumerate(o_shifts):
                base = br_base + (bi * ko + t) * c_out
                stk_ref[base:base + c_out, :] = shifted(br, s)

        # Out conv (+ReLU): its x taps reuse the branch im2col rows, its branch
        # taps are one contiguous aligned block -> two matmuls total.
        row = x_off[o_shifts[0]]
        acc = jnp.dot(wox_ref[...], stk_ref[row:row + ko * p_in, :],
                      preferred_element_type=jnp.float32)
        acc = acc + jnp.dot(wobr_ref[...], stk_ref[br_base:br_base + br_rows, :],
                            preferred_element_type=jnp.float32)
        y = jnp.maximum(acc + bo_ref[...], 0.0)          # (c_out, lanes)

        # x1 = Flatten(1) of the per-tile (batch_tile, c_out, L) view:
        # relayout-free, lane-aligned row copies into the lane-dense out block.
        for b in range(batch_tile):
            for c in range(c_out):
                x1_ref[0, b:b + 1, c * length:(c + 1) * length] = \
                    y[c:c + 1, b * length:(b + 1) * length]

        # Fused linear head on this batch tile (dropout-free, eval mode).
        x1 = x1_ref[0]                                   # (batch_tile, c_out*L)
        h = jnp.dot(x1, w0_ref[...], preferred_element_type=jnp.float32)
        h = jnp.maximum(h + b0_ref[...], 0.0)
        x2_ref[0] = h
        z = jnp.dot(h, w1_ref[...], preferred_element_type=jnp.float32) + b1_ref[...]
        x3_ref[0] = 1.0 / (1.0 + jnp.exp(-z))

    # ---- pallas_call ----------------------------------------------------------
    def const_spec(arr):
        nd = arr.ndim
        return pl.BlockSpec(arr.shape, lambda i, _nd=nd: (0,) * _nd)

    weight_args = []
    for w, b in zip(wb_packed, params["bb"]):
        weight_args += [w, b]
    weight_args += [wox, wobr, params["bo"],
                    params["w0"], params["b0"], params["w1"], params["b1"]]

    in_specs = [pl.BlockSpec((batch_tile, c_in, length), lambda i: (i, 0, 0))]
    in_specs += [const_spec(a) for a in weight_args]

    out_shape = (
        jax.ShapeDtypeStruct((grid_n, batch_tile, c_out * length), jnp.float32),
        jax.ShapeDtypeStruct((grid_n, batch_tile, hidden), jnp.float32),
        jax.ShapeDtypeStruct((grid_n, batch_tile, out_dim), jnp.float32),
    )
    out_specs = [
        pl.BlockSpec((1, batch_tile, c_out * length), lambda i: (i, 0, 0)),
        pl.BlockSpec((1, batch_tile, hidden), lambda i: (i, 0, 0)),
        pl.BlockSpec((1, batch_tile, out_dim), lambda i: (i, 0, 0)),
    ]

    x1_t, x2_t, x3_t = pl.pallas_call(
        kernel,
        out_shape=out_shape,
        grid_spec=pltpu.PrefetchScalarGridSpec(
            num_scalar_prefetch=0, grid=(grid_n,),
            in_specs=in_specs, out_specs=out_specs,
            scratch_shapes=[pltpu.VMEM((stack_rows, lanes), jnp.float32)]),
        compiler_params=pltpu.CompilerParams(
            dimension_semantics=("parallel",)),
    )(x, *weight_args)

    # Leading-dim merges only: no data movement, no wrapper transposes.
    return (x1_t.reshape(n, c_out * length),
            x2_t.reshape(n, hidden),
            x3_t.reshape(n, out_dim))


def torch_style_reference(x, p, cfg):
    """Pure-JAX re-implementation of the PyTorch module (eval mode)."""
    ks, ko = cfg["comb_kernel_sizes"], cfg["comb_out_kernel_size"]

    def auto_pad(v, k):
        pds = k - 1
        return jnp.pad(v, ((0, 0), (0, 0), (pds // 2, pds - pds // 2)))

    def conv1d(v, w_koc, b):
        w = jnp.transpose(w_koc, (1, 2, 0))    # (C_out, C_in, K)
        y = jax.lax.conv_general_dilated(
            v, w, window_strides=(1,), padding="VALID",
            dimension_numbers=("NCH", "OIH", "NCH"),
            precision=jax.lax.Precision.HIGHEST)
        return y + b.reshape(1, -1, 1)

    outs = [x]
    for w, b, k in zip(p["wb"], p["bb"], ks):
        outs.append(jax.nn.relu(conv1d(auto_pad(x, k), w, b)))
    xc = jnp.concatenate(outs, axis=1)
    y = jax.nn.relu(conv1d(auto_pad(xc, ko), p["wo_full"], p["bo"]))
    x1 = y.reshape(y.shape[0], -1)
    x2 = jax.nn.relu(jnp.dot(x1, p["w0"], precision=jax.lax.Precision.HIGHEST)
                     + p["b0"].reshape(-1))
    x3 = jax.nn.sigmoid(jnp.dot(x2, p["w1"], precision=jax.lax.Precision.HIGHEST)
                        + p["b1"].reshape(-1))
    return x1, x2, x3


if __name__ == "__main__":
    cfg = dict(
        in_channels=4, out_channels=8,
        comb_kernel_sizes=(3, 5), comb_out_kernel_size=3,
        drop_rate=0.1,                          # identity at inference
        length=128,
        linear_in_dim=8 * 128, linear_hidden_dim=32, linear_out_dim=2,
    )

    key = jax.random.PRNGKey(0)
    keys = iter(jax.random.split(key, 16))

    def nrm(shape, scale):
        return scale * jax.random.normal(next(keys), shape, jnp.float32)

    c_in, c_out, L = cfg["in_channels"], cfg["out_channels"], cfg["length"]
    ks, ko = cfg["comb_kernel_sizes"], cfg["comb_out_kernel_size"]
    H, OUT = cfg["linear_hidden_dim"], cfg["linear_out_dim"]
    c_cat = c_in + len(ks) * c_out

    params = {
        # per-branch conv weights stored as (k, c_out, c_in), biases (c_out, 1)
        "wb": [nrm((k, c_out, c_in), (c_in * k) ** -0.5) for k in ks],
        "bb": [nrm((c_out, 1), 0.1) for _ in ks],
        # out-conv over cat([x, *branches]): (ko, c_out, c_cat)
        "wo_full": nrm((ko, c_out, c_cat), (c_cat * ko) ** -0.5),
        "bo": nrm((c_out, 1), 0.1),
        "w0": nrm((cfg["linear_in_dim"], H), cfg["linear_in_dim"] ** -0.5),
        "b0": nrm((1, H), 0.1),
        "w1": nrm((H, OUT), H ** -0.5),
        "b1": nrm((1, OUT), 0.1),
    }

    N = 8
    x = jax.random.normal(next(keys), (N, c_in, L), jnp.float32)

    fwd = jax.jit(functools.partial(side_layer_forward, cfg=cfg))
    x1, x2, x3 = fwd(x, params)
    jax.block_until_ready((x1, x2, x3))

    r1, r2, r3 = torch_style_reference(x, params, cfg)
    assert x1.shape == (N, cfg["linear_in_dim"])
    assert x2.shape == (N, H) and x3.shape == (N, OUT)
    for got, want in ((x1, r1), (x2, r2), (x3, r3)):
        if not jnp.allclose(got, want, rtol=1e-2, atol=1e-2):
            raise AssertionError("Pallas kernel output does not match reference")

    print("KERNEL_OK")
</pallas_src>

<mosaic_0001>
module attributes {stable_mosaic.version = 11 : i64} {
  func.func @kernel(%arg0: i32, %arg1: memref<4x4x128xf32, #tpu.memory_space<vmem>>, %arg2: memref<8x24xf32, #tpu.memory_space<vmem>>, %arg3: memref<8x1xf32, #tpu.memory_space<vmem>>, %arg4: memref<8x40xf32, #tpu.memory_space<vmem>>, %arg5: memref<8x1xf32, #tpu.memory_space<vmem>>, %arg6: memref<8x24xf32, #tpu.memory_space<vmem>>, %arg7: memref<8x48xf32, #tpu.memory_space<vmem>>, %arg8: memref<8x1xf32, #tpu.memory_space<vmem>>, %arg9: memref<1024x32xf32, #tpu.memory_space<vmem>>, %arg10: memref<1x32xf32, #tpu.memory_space<vmem>>, %arg11: memref<32x2xf32, #tpu.memory_space<vmem>>, %arg12: memref<1x2xf32, #tpu.memory_space<vmem>>, %arg13: memref<1x4x1024xf32, #tpu.memory_space<vmem>>, %arg14: memref<1x4x32xf32, #tpu.memory_space<vmem>>, %arg15: memref<1x4x2xf32, #tpu.memory_space<vmem>>, %arg16: memref<88x512xf32, #tpu.memory_space<vmem>>) attributes {dimension_semantics = [#tpu.dimension_semantics<parallel>], iteration_bounds = array<i64: 2>, scalar_prefetch = 0 : i64, scratch_operands = 1 : i64, tpu.core_type = #tpu.core_type<tc>, window_params = [{transform_indices = @transform_0, window_bounds = array<i64: 4, 4, 128>}, {pipeline_mode = #tpu.pipeline_mode<synchronous>, transform_indices = @transform_1, window_bounds = array<i64: 8, 24>}, {pipeline_mode = #tpu.pipeline_mode<synchronous>, transform_indices = @transform_2, window_bounds = array<i64: 8, 1>}, {pipeline_mode = #tpu.pipeline_mode<synchronous>, transform_indices = @transform_3, window_bounds = array<i64: 8, 40>}, {pipeline_mode = #tpu.pipeline_mode<synchronous>, transform_indices = @transform_4, window_bounds = array<i64: 8, 1>}, {pipeline_mode = #tpu.pipeline_mode<synchronous>, transform_indices = @transform_5, window_bounds = array<i64: 8, 24>}, {pipeline_mode = #tpu.pipeline_mode<synchronous>, transform_indices = @transform_6, window_bounds = array<i64: 8, 48>}, {pipeline_mode = #tpu.pipeline_mode<synchronous>, transform_indices = @transform_7, window_bounds = array<i64: 8, 1>}, {pipeline_mode = #tpu.pipeline_mode<synchronous>, transform_indices = @transform_8, window_bounds = array<i64: 1024, 32>}, {pipeline_mode = #tpu.pipeline_mode<synchronous>, transform_indices = @transform_9, window_bounds = array<i64: 1, 32>}, {pipeline_mode = #tpu.pipeline_mode<synchronous>, transform_indices = @transform_10, window_bounds = array<i64: 32, 2>}, {pipeline_mode = #tpu.pipeline_mode<synchronous>, transform_indices = @transform_11, window_bounds = array<i64: 1, 2>}, {transform_indices = @transform_12, window_bounds = array<i64: 1, 4, 1024>}, {transform_indices = @transform_13, window_bounds = array<i64: 1, 4, 32>}, {transform_indices = @transform_14, window_bounds = array<i64: 1, 4, 2>}]} {
    %cst = arith.constant 0.000000e+00 : f32
    %0 = vector.broadcast %cst : f32 to vector<4x512xf32>
    %c4 = arith.constant 4 : index
    %c0 = arith.constant 0 : index
    %1 = vector.load %arg16[%c4, %c0] : memref<88x512xf32, #tpu.memory_space<vmem>>, vector<4x512xf32>
    tpu.vector_store %arg16[%c4, %c0], %0 {strides = array<i32>} : memref<88x512xf32, #tpu.memory_space<vmem>>, vector<4x512xf32>,
    %c12 = arith.constant 12 : index
    %c0_0 = arith.constant 0 : index
    %2 = vector.load %arg16[%c12, %c0_0] : memref<88x512xf32, #tpu.memory_space<vmem>>, vector<4x512xf32>
    tpu.vector_store %arg16[%c12, %c0_0], %0 {strides = array<i32>} : memref<88x512xf32, #tpu.memory_space<vmem>>, vector<4x512xf32>,
    %c20 = arith.constant 20 : index
    %c0_1 = arith.constant 0 : index
    %3 = vector.load %arg16[%c20, %c0_1] : memref<88x512xf32, #tpu.memory_space<vmem>>, vector<4x512xf32>
    tpu.vector_store %arg16[%c20, %c0_1], %0 {strides = array<i32>} : memref<88x512xf32, #tpu.memory_space<vmem>>, vector<4x512xf32>,
    %c28 = arith.constant 28 : index
    %c0_2 = arith.constant 0 : index
    %4 = vector.load %arg16[%c28, %c0_2] : memref<88x512xf32, #tpu.memory_space<vmem>>, vector<4x512xf32>
    tpu.vector_store %arg16[%c28, %c0_2], %0 {strides = array<i32>} : memref<88x512xf32, #tpu.memory_space<vmem>>, vector<4x512xf32>,
    %c36 = arith.constant 36 : index
    %c0_3 = arith.constant 0 : index
    %5 = vector.load %arg16[%c36, %c0_3] : memref<88x512xf32, #tpu.memory_space<vmem>>, vector<4x512xf32>
    tpu.vector_store %arg16[%c36, %c0_3], %0 {strides = array<i32>} : memref<88x512xf32, #tpu.memory_space<vmem>>, vector<4x512xf32>,
    %c0_4 = arith.constant 0 : index
    %c0_5 = arith.constant 0 : index
    %c0_6 = arith.constant 0 : index
    %6 = vector.load %arg1[%c0_4, %c0_5, %c0_6] : memref<4x4x128xf32, #tpu.memory_space<vmem>>, vector<1x4x128xf32>
    %7 = vector.shape_cast %6 : vector<1x4x128xf32> to vector<4x128xf32>
    %c16 = arith.constant 16 : index
    %c0_7 = arith.constant 0 : index
    %8 = vector.load %arg16[%c16, %c0_7] : memref<88x512xf32, #tpu.memory_space<vmem>>, vector<4x128xf32>
    tpu.vector_store %arg16[%c16, %c0_7], %7 {strides = array<i32>} : memref<88x512xf32, #tpu.memory_space<vmem>>, vector<4x128xf32>,
    %c1 = arith.constant 1 : index
    %c0_8 = arith.constant 0 : index
    %c0_9 = arith.constant 0 : index
    %9 = vector.load %arg1[%c1, %c0_8, %c0_9] : memref<4x4x128xf32, #tpu.memory_space<vmem>>, vector<1x4x128xf32>
    %10 = vector.shape_cast %9 : vector<1x4x128xf32> to vector<4x128xf32>
    %c16_10 = arith.constant 16 : index
    %c128 = arith.constant 128 : index
    %11 = vector.load %arg16[%c16_10, %c128] : memref<88x512xf32, #tpu.memory_space<vmem>>, vector<4x128xf32>
    tpu.vector_store %arg16[%c16_10, %c128], %10 {strides = array<i32>} : memref<88x512xf32, #tpu.memory_space<vmem>>, vector<4x128xf32>,
    %c2 = arith.constant 2 : index
    %c0_11 = arith.constant 0 : index
    %c0_12 = arith.constant 0 : index
    %12 = vector.load %arg1[%c2, %c0_11, %c0_12] : memref<4x4x128xf32, #tpu.memory_space<vmem>>, vector<1x4x128xf32>
    %13 = vector.shape_cast %12 : vector<1x4x128xf32> to vector<4x128xf32>
    %c16_13 = arith.constant 16 : index
    %c256 = arith.constant 256 : index
    %14 = vector.load %arg16[%c16_13, %c256] : memref<88x512xf32, #tpu.memory_space<vmem>>, vector<4x128xf32>
    tpu.vector_store %arg16[%c16_13, %c256], %13 {strides = array<i32>} : memref<88x512xf32, #tpu.memory_space<vmem>>, vector<4x128xf32>,
    %c3 = arith.constant 3 : index
    %c0_14 = arith.constant 0 : index
    %c0_15 = arith.constant 0 : index
    %15 = vector.load %arg1[%c3, %c0_14, %c0_15] : memref<4x4x128xf32, #tpu.memory_space<vmem>>, vector<1x4x128xf32>
    %16 = vector.shape_cast %15 : vector<1x4x128xf32> to vector<4x128xf32>
    %c16_16 = arith.constant 16 : index
    %c384 = arith.constant 384 : index
    %17 = vector.load %arg16[%c16_16, %c384] : memref<88x512xf32, #tpu.memory_space<vmem>>, vector<4x128xf32>
    tpu.vector_store %arg16[%c16_16, %c384], %16 {strides = array<i32>} : memref<88x512xf32, #tpu.memory_space<vmem>>, vector<4x128xf32>,
    %c16_17 = arith.constant 16 : index
    %c0_18 = arith.constant 0 : index
    %18 = vector.load %arg16[%c16_17, %c0_18] : memref<88x512xf32, #tpu.memory_space<vmem>>, vector<4x512xf32>
    %19 = tpu.iota {dimensions = array<i32: 1>} : vector<1x512xi32>
    %c128_i32 = arith.constant 128 : i32
    %c0_i32 = arith.constant 0 : i32
    %20 = arith.cmpi eq, %c128_i32, %c0_i32 : i32
    %c1_i32 = arith.constant 1 : i32
    %21 = arith.select %20, %c1_i32, %c128_i32 : i32
    %22 = vector.broadcast %21 : i32 to vector<1x512xi32>
    %23 = arith.remsi %19, %22 : vector<1x512xi32>
    %c0_i32_19 = arith.constant 0 : i32
    %24 = vector.broadcast %c0_i32_19 : i32 to vector<1x512xi32>
    %25 = arith.cmpi ne, %23, %24 : vector<1x512xi32>
    %c0_i32_20 = arith.constant 0 : i32
    %26 = vector.broadcast %c0_i32_20 : i32 to vector<1x512xi32>
    %27 = arith.cmpi slt, %23, %26 : vector<1x512xi32>
    %c0_i32_21 = arith.constant 0 : i32
    %28 = arith.cmpi slt, %21, %c0_i32_21 : i32
    %29 = vector.broadcast %28 : i1 to vector<1x512xi1>
    %30 = vector.broadcast %29 : vector<1x512xi1> to vector<1x512xi1>
    %31 = arith.xori %27, %30 : vector<1x512xi1>
    %32 = arith.andi %31, %25 : vector<1x512xi1>
    %33 = vector.broadcast %21 : i32 to vector<1x512xi32>
    %34 = arith.addi %23, %33 : vector<1x512xi32>
    %35 = arith.select %32, %34, %23 : vector<1x512xi1>, vector<1x512xi32>
    %c2_i32 = arith.constant 2 : i32
    %36 = vector.broadcast %c2_i32 : i32 to vector<1x512xi32>
    %37 = arith.cmpi sge, %35, %36 : vector<1x512xi32>
    %c1_i32_22 = arith.constant 1 : i32
    %38 = vector.broadcast %c1_i32_22 : i32 to vector<1x512xi32>
    %39 = arith.cmpi sge, %35, %38 : vector<1x512xi32>
    %c127_i32 = arith.constant 127 : i32
    %40 = vector.broadcast %c127_i32 : i32 to vector<1x512xi32>
    %41 = arith.cmpi slt, %35, %40 : vector<1x512xi32>
    %c126_i32 = arith.constant 126 : i32
    %42 = vector.broadcast %c126_i32 : i32 to vector<1x512xi32>
    %43 = arith.cmpi slt, %35, %42 : vector<1x512xi32>
    %c2_i32_23 = arith.constant 2 : i32
    %44 = tpu.dynamic_rotate %18 by %c2_i32_23 dim 1 : vector<4x512xf32>, i32 -> vector<4x512xf32>
    %cst_24 = arith.constant 0.000000e+00 : f32
    %45 = vector.shape_cast %37 : vector<1x512xi1> to vector<1x512xi1>
    %46 = vector.broadcast %45 : vector<1x512xi1> to vector<4x512xi1>
    %47 = vector.broadcast %cst_24 : f32 to vector<4x512xf32>
    %48 = arith.select %46, %44, %47 : vector<4x512xi1>, vector<4x512xf32>
    %c0_25 = arith.constant 0 : index
    %c0_26 = arith.constant 0 : index
    %49 = vector.load %arg16[%c0_25, %c0_26] : memref<88x512xf32, #tpu.memory_space<vmem>>, vector<4x512xf32>
    tpu.vector_store %arg16[%c0_25, %c0_26], %48 {strides = array<i32>} : memref<88x512xf32, #tpu.memory_space<vmem>>, vector<4x512xf32>,
    %c1_i32_27 = arith.constant 1 : i32
    %50 = tpu.dynamic_rotate %18 by %c1_i32_27 dim 1 : vector<4x512xf32>, i32 -> vector<4x512xf32>
    %cst_28 = arith.constant 0.000000e+00 : f32
    %51 = vector.shape_cast %39 : vector<1x512xi1> to vector<1x512xi1>
    %52 = vector.broadcast %51 : vector<1x512xi1> to vector<4x512xi1>
    %53 = vector.broadcast %cst_28 : f32 to vector<4x512xf32>
    %54 = arith.select %52, %50, %53 : vector<4x512xi1>, vector<4x512xf32>
    %c8 = arith.constant 8 : index
    %c0_29 = arith.constant 0 : index
    %55 = vector.load %arg16[%c8, %c0_29] : memref<88x512xf32, #tpu.memory_space<vmem>>, vector<4x512xf32>
    tpu.vector_store %arg16[%c8, %c0_29], %54 {strides = array<i32>} : memref<88x512xf32, #tpu.memory_space<vmem>>, vector<4x512xf32>,
    %c511_i32 = arith.constant 511 : i32
    %56 = tpu.dynamic_rotate %18 by %c511_i32 dim 1 : vector<4x512xf32>, i32 -> vector<4x512xf32>
    %cst_30 = arith.constant 0.000000e+00 : f32
    %57 = vector.shape_cast %41 : vector<1x512xi1> to vector<1x512xi1>
    %58 = vector.broadcast %57 : vector<1x512xi1> to vector<4x512xi1>
    %59 = vector.broadcast %cst_30 : f32 to vector<4x512xf32>
    %60 = arith.select %58, %56, %59 : vector<4x512xi1>, vector<4x512xf32>
    %c24 = arith.constant 24 : index
    %c0_31 = arith.constant 0 : index
    %61 = vector.load %arg16[%c24, %c0_31] : memref<88x512xf32, #tpu.memory_space<vmem>>, vector<4x512xf32>
    tpu.vector_store %arg16[%c24, %c0_31], %60 {strides = array<i32>} : memref<88x512xf32, #tpu.memory_space<vmem>>, vector<4x512xf32>,
    %c510_i32 = arith.constant 510 : i32
    %62 = tpu.dynamic_rotate %18 by %c510_i32 dim 1 : vector<4x512xf32>, i32 -> vector<4x512xf32>
    %cst_32 = arith.constant 0.000000e+00 : f32
    %63 = vector.shape_cast %43 : vector<1x512xi1> to vector<1x512xi1>
    %64 = vector.broadcast %63 : vector<1x512xi1> to vector<4x512xi1>
    %65 = vector.broadcast %cst_32 : f32 to vector<4x512xf32>
    %66 = arith.select %64, %62, %65 : vector<4x512xi1>, vector<4x512xf32>
    %c32 = arith.constant 32 : index
    %c0_33 = arith.constant 0 : index
    %67 = vector.load %arg16[%c32, %c0_33] : memref<88x512xf32, #tpu.memory_space<vmem>>, vector<4x512xf32>
    tpu.vector_store %arg16[%c32, %c0_33], %66 {strides = array<i32>} : memref<88x512xf32, #tpu.memory_space<vmem>>, vector<4x512xf32>,
    %c0_34 = arith.constant 0 : index
    %c0_35 = arith.constant 0 : index
    %68 = vector.load %arg2[%c0_34, %c0_35] : memref<8x24xf32, #tpu.memory_space<vmem>>, vector<8x24xf32>
    %c8_36 = arith.constant 8 : index
    %c0_37 = arith.constant 0 : index
    %69 = vector.load %arg16[%c8_36, %c0_37] : memref<88x512xf32, #tpu.memory_space<vmem>>, vector<24x512xf32>
    %cst_38 = arith.constant dense<0.000000e+00> : vector<8x512xf32>
    %70 = tpu.matmul %68, %69, %cst_38 {dimension_numbers = #tpu.dot_dimension_numbers<[1], [0], [0], [1], [0, 0, 1, 1], [], []>} : vector<8x24xf32>, vector<24x512xf32>, vector<8x512xf32> -> vector<8x512xf32>
    %c0_39 = arith.constant 0 : index
    %c0_40 = arith.constant 0 : index
    %71 = vector.load %arg3[%c0_39, %c0_40] : memref<8x1xf32, #tpu.memory_space<vmem>>, vector<8x1xf32>
    %72 = vector.broadcast %71 : vector<8x1xf32> to vector<8x512xf32>
    %73 = arith.addf %70, %72 : vector<8x512xf32>
    %cst_41 = arith.constant 0.000000e+00 : f32
    %74 = vector.broadcast %cst_41 : f32 to vector<8x512xf32>
    %75 = arith.maximumf %73, %74 : vector<8x512xf32>
    %c1_i32_42 = arith.constant 1 : i32
    %76 = tpu.dynamic_rotate %75 by %c1_i32_42 dim 1 : vector<8x512xf32>, i32 -> vector<8x512xf32>
    %cst_43 = arith.constant 0.000000e+00 : f32
    %77 = vector.shape_cast %39 : vector<1x512xi1> to vector<1x512xi1>
    %78 = vector.broadcast %77 : vector<1x512xi1> to vector<8x512xi1>
    %79 = vector.broadcast %cst_43 : f32 to vector<8x512xf32>
    %80 = arith.select %78, %76, %79 : vector<8x512xi1>, vector<8x512xf32>
    %c40 = arith.constant 40 : index
    %c0_44 = arith.constant 0 : index
    %81 = vector.load %arg16[%c40, %c0_44] : memref<88x512xf32, #tpu.memory_space<vmem>>, vector<8x512xf32>
    tpu.vector_store %arg16[%c40, %c0_44], %80 {strides = array<i32>} : memref<88x512xf32, #tpu.memory_space<vmem>>, vector<8x512xf32>,
    %c48 = arith.constant 48 : index
    %c0_45 = arith.constant 0 : index
    %82 = vector.load %arg16[%c48, %c0_45] : memref<88x512xf32, #tpu.memory_space<vmem>>, vector<8x512xf32>
    tpu.vector_store %arg16[%c48, %c0_45], %75 {strides = array<i32>} : memref<88x512xf32, #tpu.memory_space<vmem>>, vector<8x512xf32>,
    %c511_i32_46 = arith.constant 511 : i32
    %83 = tpu.dynamic_rotate %75 by %c511_i32_46 dim 1 : vector<8x512xf32>, i32 -> vector<8x512xf32>
    %cst_47 = arith.constant 0.000000e+00 : f32
    %84 = vector.shape_cast %41 : vector<1x512xi1> to vector<1x512xi1>
    %85 = vector.broadcast %84 : vector<1x512xi1> to vector<8x512xi1>
    %86 = vector.broadcast %cst_47 : f32 to vector<8x512xf32>
    %87 = arith.select %85, %83, %86 : vector<8x512xi1>, vector<8x512xf32>
    %c56 = arith.constant 56 : index
    %c0_48 = arith.constant 0 : index
    %88 = vector.load %arg16[%c56, %c0_48] : memref<88x512xf32, #tpu.memory_space<vmem>>, vector<8x512xf32>
    tpu.vector_store %arg16[%c56, %c0_48], %87 {strides = array<i32>} : memref<88x512xf32, #tpu.memory_space<vmem>>, vector<8x512xf32>,
    %c0_49 = arith.constant 0 : index
    %c0_50 = arith.constant 0 : index
    %89 = vector.load %arg4[%c0_49, %c0_50] : memref<8x40xf32, #tpu.memory_space<vmem>>, vector<8x40xf32>
    %c0_51 = arith.constant 0 : index
    %c0_52 = arith.constant 0 : index
    %90 = vector.load %arg16[%c0_51, %c0_52] : memref<88x512xf32, #tpu.memory_space<vmem>>, vector<40x512xf32>
    %cst_53 = arith.constant dense<0.000000e+00> : vector<8x512xf32>
    %91 = tpu.matmul %89, %90, %cst_53 {dimension_numbers = #tpu.dot_dimension_numbers<[1], [0], [0], [1], [0, 0, 1, 1], [], []>} : vector<8x40xf32>, vector<40x512xf32>, vector<8x512xf32> -> vector<8x512xf32>
    %c0_54 = arith.constant 0 : index
    %c0_55 = arith.constant 0 : index
    %92 = vector.load %arg5[%c0_54, %c0_55] : memref<8x1xf32, #tpu.memory_space<vmem>>, vector<8x1xf32>
    %93 = vector.broadcast %92 : vector<8x1xf32> to vector<8x512xf32>
    %94 = arith.addf %91, %93 : vector<8x512xf32>
    %cst_56 = arith.constant 0.000000e+00 : f32
    %95 = vector.broadcast %cst_56 : f32 to vector<8x512xf32>
    %96 = arith.maximumf %94, %95 : vector<8x512xf32>
    %c1_i32_57 = arith.constant 1 : i32
    %97 = tpu.dynamic_rotate %96 by %c1_i32_57 dim 1 : vector<8x512xf32>, i32 -> vector<8x512xf32>
    %cst_58 = arith.constant 0.000000e+00 : f32
    %98 = vector.shape_cast %39 : vector<1x512xi1> to vector<1x512xi1>
    %99 = vector.broadcast %98 : vector<1x512xi1> to vector<8x512xi1>
    %100 = vector.broadcast %cst_58 : f32 to vector<8x512xf32>
    %101 = arith.select %99, %97, %100 : vector<8x512xi1>, vector<8x512xf32>
    %c64 = arith.constant 64 : index
    %c0_59 = arith.constant 0 : index
    %102 = vector.load %arg16[%c64, %c0_59] : memref<88x512xf32, #tpu.memory_space<vmem>>, vector<8x512xf32>
    tpu.vector_store %arg16[%c64, %c0_59], %101 {strides = array<i32>} : memref<88x512xf32, #tpu.memory_space<vmem>>, vector<8x512xf32>,
    %c72 = arith.constant 72 : index
    %c0_60 = arith.constant 0 : index
    %103 = vector.load %arg16[%c72, %c0_60] : memref<88x512xf32, #tpu.memory_space<vmem>>, vector<8x512xf32>
    tpu.vector_store %arg16[%c72, %c0_60], %96 {strides = array<i32>} : memref<88x512xf32, #tpu.memory_space<vmem>>, vector<8x512xf32>,
    %c511_i32_61 = arith.constant 511 : i32
    %104 = tpu.dynamic_rotate %96 by %c511_i32_61 dim 1 : vector<8x512xf32>, i32 -> vector<8x512xf32>
    %cst_62 = arith.constant 0.000000e+00 : f32
    %105 = vector.shape_cast %41 : vector<1x512xi1> to vector<1x512xi1>
    %106 = vector.broadcast %105 : vector<1x512xi1> to vector<8x512xi1>
    %107 = vector.broadcast %cst_62 : f32 to vector<8x512xf32>
    %108 = arith.select %106, %104, %107 : vector<8x512xi1>, vector<8x512xf32>
    %c80 = arith.constant 80 : index
    %c0_63 = arith.constant 0 : index
    %109 = vector.load %arg16[%c80, %c0_63] : memref<88x512xf32, #tpu.memory_space<vmem>>, vector<8x512xf32>
    tpu.vector_store %arg16[%c80, %c0_63], %108 {strides = array<i32>} : memref<88x512xf32, #tpu.memory_space<vmem>>, vector<8x512xf32>,
    %c0_64 = arith.constant 0 : index
    %c0_65 = arith.constant 0 : index
    %110 = vector.load %arg6[%c0_64, %c0_65] : memref<8x24xf32, #tpu.memory_space<vmem>>, vector<8x24xf32>
    %c8_66 = arith.constant 8 : index
    %c0_67 = arith.constant 0 : index
    %111 = vector.load %arg16[%c8_66, %c0_67] : memref<88x512xf32, #tpu.memory_space<vmem>>, vector<24x512xf32>
    %cst_68 = arith.constant dense<0.000000e+00> : vector<8x512xf32>
    %112 = tpu.matmul %110, %111, %cst_68 {dimension_numbers = #tpu.dot_dimension_numbers<[1], [0], [0], [1], [0, 0, 1, 1], [], []>} : vector<8x24xf32>, vector<24x512xf32>, vector<8x512xf32> -> vector<8x512xf32>
    %c0_69 = arith.constant 0 : index
    %c0_70 = arith.constant 0 : index
    %113 = vector.load %arg7[%c0_69, %c0_70] : memref<8x48xf32, #tpu.memory_space<vmem>>, vector<8x48xf32>
    %c40_71 = arith.constant 40 : index
    %c0_72 = arith.constant 0 : index
    %114 = vector.load %arg16[%c40_71, %c0_72] : memref<88x512xf32, #tpu.memory_space<vmem>>, vector<48x512xf32>
    %cst_73 = arith.constant dense<0.000000e+00> : vector<8x512xf32>
    %115 = tpu.matmul %113, %114, %cst_73 {dimension_numbers = #tpu.dot_dimension_numbers<[1], [0], [0], [1], [0, 0, 1, 1], [], []>} : vector<8x48xf32>, vector<48x512xf32>, vector<8x512xf32> -> vector<8x512xf32>
    %116 = arith.addf %112, %115 : vector<8x512xf32>
    %c0_74 = arith.constant 0 : index
    %c0_75 = arith.constant 0 : index
    %117 = vector.load %arg8[%c0_74, %c0_75] : memref<8x1xf32, #tpu.memory_space<vmem>>, vector<8x1xf32>
    %118 = vector.broadcast %117 : vector<8x1xf32> to vector<8x512xf32>
    %119 = arith.addf %116, %118 : vector<8x512xf32>
    %cst_76 = arith.constant 0.000000e+00 : f32
    %120 = vector.broadcast %cst_76 : f32 to vector<8x512xf32>
    %121 = arith.maximumf %119, %120 : vector<8x512xf32>
    %122 = vector.extract_strided_slice %121 {offsets = [0, 0], sizes = [1, 128], strides = [1, 1]} : vector<8x512xf32> to vector<1x128xf32>
    %c0_77 = arith.constant 0 : index
    %c0_78 = arith.constant 0 : index
    %c0_79 = arith.constant 0 : index
    %123 = vector.load %arg13[%c0_77, %c0_78, %c0_79] : memref<1x4x1024xf32, #tpu.memory_space<vmem>>, vector<1x1x128xf32>
    %124 = vector.shape_cast %123 : vector<1x1x128xf32> to vector<1x128xf32>
    %125 = vector.shape_cast %122 : vector<1x128xf32> to vector<1x1x128xf32>
    tpu.vector_store %arg13[%c0_77, %c0_78, %c0_79], %125 {strides = array<i32>} : memref<1x4x1024xf32, #tpu.memory_space<vmem>>, vector<1x1x128xf32>,
    %126 = vector.extract_strided_slice %121 {offsets = [1, 0], sizes = [1, 128], strides = [1, 1]} : vector<8x512xf32> to vector<1x128xf32>
    %c0_80 = arith.constant 0 : index
    %c0_81 = arith.constant 0 : index
    %c128_82 = arith.constant 128 : index
    %127 = vector.load %arg13[%c0_80, %c0_81, %c128_82] : memref<1x4x1024xf32, #tpu.memory_space<vmem>>, vector<1x1x128xf32>
    %128 = vector.shape_cast %127 : vector<1x1x128xf32> to vector<1x128xf32>
    %129 = vector.shape_cast %126 : vector<1x128xf32> to vector<1x1x128xf32>
    tpu.vector_store %arg13[%c0_80, %c0_81, %c128_82], %129 {strides = array<i32>} : memref<1x4x1024xf32, #tpu.memory_space<vmem>>, vector<1x1x128xf32>,
    %130 = vector.extract_strided_slice %121 {offsets = [2, 0], sizes = [1, 128], strides = [1, 1]} : vector<8x512xf32> to vector<1x128xf32>
    %c0_83 = arith.constant 0 : index
    %c0_84 = arith.constant 0 : index
    %c256_85 = arith.constant 256 : index
    %131 = vector.load %arg13[%c0_83, %c0_84, %c256_85] : memref<1x4x1024xf32, #tpu.memory_space<vmem>>, vector<1x1x128xf32>
    %132 = vector.shape_cast %131 : vector<1x1x128xf32> to vector<1x128xf32>
    %133 = vector.shape_cast %130 : vector<1x128xf32> to vector<1x1x128xf32>
    tpu.vector_store %arg13[%c0_83, %c0_84, %c256_85], %133 {strides = array<i32>} : memref<1x4x1024xf32, #tpu.memory_space<vmem>>, vector<1x1x128xf32>,
    %134 = vector.extract_strided_slice %121 {offsets = [3, 0], sizes = [1, 128], strides = [1, 1]} : vector<8x512xf32> to vector<1x128xf32>
    %c0_86 = arith.constant 0 : index
    %c0_87 = arith.constant 0 : index
    %c384_88 = arith.constant 384 : index
    %135 = vector.load %arg13[%c0_86, %c0_87, %c384_88] : memref<1x4x1024xf32, #tpu.memory_space<vmem>>, vector<1x1x128xf32>
    %136 = vector.shape_cast %135 : vector<1x1x128xf32> to vector<1x128xf32>
    %137 = vector.shape_cast %134 : vector<1x128xf32> to vector<1x1x128xf32>
    tpu.vector_store %arg13[%c0_86, %c0_87, %c384_88], %137 {strides = array<i32>} : memref<1x4x1024xf32, #tpu.memory_space<vmem>>, vector<1x1x128xf32>,
    %138 = vector.extract_strided_slice %121 {offsets = [4, 0], sizes = [1, 128], strides = [1, 1]} : vector<8x512xf32> to vector<1x128xf32>
    %c0_89 = arith.constant 0 : index
    %c0_90 = arith.constant 0 : index
    %c512 = arith.constant 512 : index
    %139 = vector.load %arg13[%c0_89, %c0_90, %c512] : memref<1x4x1024xf32, #tpu.memory_space<vmem>>, vector<1x1x128xf32>
    %140 = vector.shape_cast %139 : vector<1x1x128xf32> to vector<1x128xf32>
    %141 = vector.shape_cast %138 : vector<1x128xf32> to vector<1x1x128xf32>
    tpu.vector_store %arg13[%c0_89, %c0_90, %c512], %141 {strides = array<i32>} : memref<1x4x1024xf32, #tpu.memory_space<vmem>>, vector<1x1x128xf32>,
    %142 = vector.extract_strided_slice %121 {offsets = [5, 0], sizes = [1, 128], strides = [1, 1]} : vector<8x512xf32> to vector<1x128xf32>
    %c0_91 = arith.constant 0 : index
    %c0_92 = arith.constant 0 : index
    %c640 = arith.constant 640 : index
    %143 = vector.load %arg13[%c0_91, %c0_92, %c640] : memref<1x4x1024xf32, #tpu.memory_space<vmem>>, vector<1x1x128xf32>
    %144 = vector.shape_cast %143 : vector<1x1x128xf32> to vector<1x128xf32>
    %145 = vector.shape_cast %142 : vector<1x128xf32> to vector<1x1x128xf32>
    tpu.vector_store %arg13[%c0_91, %c0_92, %c640], %145 {strides = array<i32>} : memref<1x4x1024xf32, #tpu.memory_space<vmem>>, vector<1x1x128xf32>,
    %146 = vector.extract_strided_slice %121 {offsets = [6, 0], sizes = [1, 128], strides = [1, 1]} : vector<8x512xf32> to vector<1x128xf32>
    %c0_93 = arith.constant 0 : index
    %c0_94 = arith.constant 0 : index
    %c768 = arith.constant 768 : index
    %147 = vector.load %arg13[%c0_93, %c0_94, %c768] : memref<1x4x1024xf32, #tpu.memory_space<vmem>>, vector<1x1x128xf32>
    %148 = vector.shape_cast %147 : vector<1x1x128xf32> to vector<1x128xf32>
    %149 = vector.shape_cast %146 : vector<1x128xf32> to vector<1x1x128xf32>
    tpu.vector_store %arg13[%c0_93, %c0_94, %c768], %149 {strides = array<i32>} : memref<1x4x1024xf32, #tpu.memory_space<vmem>>, vector<1x1x128xf32>,
    %150 = vector.extract_strided_slice %121 {offsets = [7, 0], sizes = [1, 128], strides = [1, 1]} : vector<8x512xf32> to vector<1x128xf32>
    %c0_95 = arith.constant 0 : index
    %c0_96 = arith.constant 0 : index
    %c896 = arith.constant 896 : index
    %151 = vector.load %arg13[%c0_95, %c0_96, %c896] : memref<1x4x1024xf32, #tpu.memory_space<vmem>>, vector<1x1x128xf32>
    %152 = vector.shape_cast %151 : vector<1x1x128xf32> to vector<1x128xf32>
    %153 = vector.shape_cast %150 : vector<1x128xf32> to vector<1x1x128xf32>
    tpu.vector_store %arg13[%c0_95, %c0_96, %c896], %153 {strides = array<i32>} : memref<1x4x1024xf32, #tpu.memory_space<vmem>>, vector<1x1x128xf32>,
    %154 = vector.extract_strided_slice %121 {offsets = [0, 128], sizes = [1, 128], strides = [1, 1]} : vector<8x512xf32> to vector<1x128xf32>
    %c0_97 = arith.constant 0 : index
    %c1_98 = arith.constant 1 : index
    %c0_99 = arith.constant 0 : index
    %155 = vector.load %arg13[%c0_97, %c1_98, %c0_99] : memref<1x4x1024xf32, #tpu.memory_space<vmem>>, vector<1x1x128xf32>
    %156 = vector.shape_cast %155 : vector<1x1x128xf32> to vector<1x128xf32>
    %157 = vector.shape_cast %154 : vector<1x128xf32> to vector<1x1x128xf32>
    tpu.vector_store %arg13[%c0_97, %c1_98, %c0_99], %157 {strides = array<i32>} : memref<1x4x1024xf32, #tpu.memory_space<vmem>>, vector<1x1x128xf32>,
    %158 = vector.extract_strided_slice %121 {offsets = [1, 128], sizes = [1, 128], strides = [1, 1]} : vector<8x512xf32> to vector<1x128xf32>
    %c0_100 = arith.constant 0 : index
    %c1_101 = arith.constant 1 : index
    %c128_102 = arith.constant 128 : index
    %159 = vector.load %arg13[%c0_100, %c1_101, %c128_102] : memref<1x4x1024xf32, #tpu.memory_space<vmem>>, vector<1x1x128xf32>
    %160 = vector.shape_cast %159 : vector<1x1x128xf32> to vector<1x128xf32>
    %161 = vector.shape_cast %158 : vector<1x128xf32> to vector<1x1x128xf32>
    tpu.vector_store %arg13[%c0_100, %c1_101, %c128_102], %161 {strides = array<i32>} : memref<1x4x1024xf32, #tpu.memory_space<vmem>>, vector<1x1x128xf32>,
    %162 = vector.extract_strided_slice %121 {offsets = [2, 128], sizes = [1, 128], strides = [1, 1]} : vector<8x512xf32> to vector<1x128xf32>
    %c0_103 = arith.constant 0 : index
    %c1_104 = arith.constant 1 : index
    %c256_105 = arith.constant 256 : index
    %163 = vector.load %arg13[%c0_103, %c1_104, %c256_105] : memref<1x4x1024xf32, #tpu.memory_space<vmem>>, vector<1x1x128xf32>
    %164 = vector.shape_cast %163 : vector<1x1x128xf32> to vector<1x128xf32>
    %165 = vector.shape_cast %162 : vector<1x128xf32> to vector<1x1x128xf32>
    tpu.vector_store %arg13[%c0_103, %c1_104, %c256_105], %165 {strides = array<i32>} : memref<1x4x1024xf32, #tpu.memory_space<vmem>>, vector<1x1x128xf32>,
    %166 = vector.extract_strided_slice %121 {offsets = [3, 128], sizes = [1, 128], strides = [1, 1]} : vector<8x512xf32> to vector<1x128xf32>
    %c0_106 = arith.constant 0 : index
    %c1_107 = arith.constant 1 : index
    %c384_108 = arith.constant 384 : index
    %167 = vector.load %arg13[%c0_106, %c1_107, %c384_108] : memref<1x4x1024xf32, #tpu.memory_space<vmem>>, vector<1x1x128xf32>
    %168 = vector.shape_cast %167 : vector<1x1x128xf32> to vector<1x128xf32>
    %169 = vector.shape_cast %166 : vector<1x128xf32> to vector<1x1x128xf32>
    tpu.vector_store %arg13[%c0_106, %c1_107, %c384_108], %169 {strides = array<i32>} : memref<1x4x1024xf32, #tpu.memory_space<vmem>>, vector<1x1x128xf32>,
    %170 = vector.extract_strided_slice %121 {offsets = [4, 128], sizes = [1, 128], strides = [1, 1]} : vector<8x512xf32> to vector<1x128xf32>
    %c0_109 = arith.constant 0 : index
    %c1_110 = arith.constant 1 : index
    %c512_111 = arith.constant 512 : index
    %171 = vector.load %arg13[%c0_109, %c1_110, %c512_111] : memref<1x4x1024xf32, #tpu.memory_space<vmem>>, vector<1x1x128xf32>
    %172 = vector.shape_cast %171 : vector<1x1x128xf32> to vector<1x128xf32>
    %173 = vector.shape_cast %170 : vector<1x128xf32> to vector<1x1x128xf32>
    tpu.vector_store %arg13[%c0_109, %c1_110, %c512_111], %173 {strides = array<i32>} : memref<1x4x1024xf32, #tpu.memory_space<vmem>>, vector<1x1x128xf32>,
    %174 = vector.extract_strided_slice %121 {offsets = [5, 128], sizes = [1, 128], strides = [1, 1]} : vector<8x512xf32> to vector<1x128xf32>
    %c0_112 = arith.constant 0 : index
    %c1_113 = arith.constant 1 : index
    %c640_114 = arith.constant 640 : index
    %175 = vector.load %arg13[%c0_112, %c1_113, %c640_114] : memref<1x4x1024xf32, #tpu.memory_space<vmem>>, vector<1x1x128xf32>
    %176 = vector.shape_cast %175 : vector<1x1x128xf32> to vector<1x128xf32>
    %177 = vector.shape_cast %174 : vector<1x128xf32> to vector<1x1x128xf32>
    tpu.vector_store %arg13[%c0_112, %c1_113, %c640_114], %177 {strides = array<i32>} : memref<1x4x1024xf32, #tpu.memory_space<vmem>>, vector<1x1x128xf32>,
    %178 = vector.extract_strided_slice %121 {offsets = [6, 128], sizes = [1, 128], strides = [1, 1]} : vector<8x512xf32> to vector<1x128xf32>
    %c0_115 = arith.constant 0 : index
    %c1_116 = arith.constant 1 : index
    %c768_117 = arith.constant 768 : index
    %179 = vector.load %arg13[%c0_115, %c1_116, %c768_117] : memref<1x4x1024xf32, #tpu.memory_space<vmem>>, vector<1x1x128xf32>
    %180 = vector.shape_cast %179 : vector<1x1x128xf32> to vector<1x128xf32>
    %181 = vector.shape_cast %178 : vector<1x128xf32> to vector<1x1x128xf32>
    tpu.vector_store %arg13[%c0_115, %c1_116, %c768_117], %181 {strides = array<i32>} : memref<1x4x1024xf32, #tpu.memory_space<vmem>>, vector<1x1x128xf32>,
    %182 = vector.extract_strided_slice %121 {offsets = [7, 128], sizes = [1, 128], strides = [1, 1]} : vector<8x512xf32> to vector<1x128xf32>
    %c0_118 = arith.constant 0 : index
    %c1_119 = arith.constant 1 : index
    %c896_120 = arith.constant 896 : index
    %183 = vector.load %arg13[%c0_118, %c1_119, %c896_120] : memref<1x4x1024xf32, #tpu.memory_space<vmem>>, vector<1x1x128xf32>
    %184 = vector.shape_cast %183 : vector<1x1x128xf32> to vector<1x128xf32>
    %185 = vector.shape_cast %182 : vector<1x128xf32> to vector<1x1x128xf32>
    tpu.vector_store %arg13[%c0_118, %c1_119, %c896_120], %185 {strides = array<i32>} : memref<1x4x1024xf32, #tpu.memory_space<vmem>>, vector<1x1x128xf32>,
    %186 = vector.extract_strided_slice %121 {offsets = [0, 256], sizes = [1, 128], strides = [1, 1]} : vector<8x512xf32> to vector<1x128xf32>
    %c0_121 = arith.constant 0 : index
    %c2_122 = arith.constant 2 : index
    %c0_123 = arith.constant 0 : index
    %187 = vector.load %arg13[%c0_121, %c2_122, %c0_123] : memref<1x4x1024xf32, #tpu.memory_space<vmem>>, vector<1x1x128xf32>
    %188 = vector.shape_cast %187 : vector<1x1x128xf32> to vector<1x128xf32>
    %189 = vector.shape_cast %186 : vector<1x128xf32> to vector<1x1x128xf32>
    tpu.vector_store %arg13[%c0_121, %c2_122, %c0_123], %189 {strides = array<i32>} : memref<1x4x1024xf32, #tpu.memory_space<vmem>>, vector<1x1x128xf32>,
    %190 = vector.extract_strided_slice %121 {offsets = [1, 256], sizes = [1, 128], strides = [1, 1]} : vector<8x512xf32> to vector<1x128xf32>
    %c0_124 = arith.constant 0 : index
    %c2_125 = arith.constant 2 : index
    %c128_126 = arith.constant 128 : index
    %191 = vector.load %arg13[%c0_124, %c2_125, %c128_126] : memref<1x4x1024xf32, #tpu.memory_space<vmem>>, vector<1x1x128xf32>
    %192 = vector.shape_cast %191 : vector<1x1x128xf32> to vector<1x128xf32>
    %193 = vector.shape_cast %190 : vector<1x128xf32> to vector<1x1x128xf32>
    tpu.vector_store %arg13[%c0_124, %c2_125, %c128_126], %193 {strides = array<i32>} : memref<1x4x1024xf32, #tpu.memory_space<vmem>>, vector<1x1x128xf32>,
    %194 = vector.extract_strided_slice %121 {offsets = [2, 256], sizes = [1, 128], strides = [1, 1]} : vector<8x512xf32> to vector<1x128xf32>
    %c0_127 = arith.constant 0 : index
    %c2_128 = arith.constant 2 : index
    %c256_129 = arith.constant 256 : index
    %195 = vector.load %arg13[%c0_127, %c2_128, %c256_129] : memref<1x4x1024xf32, #tpu.memory_space<vmem>>, vector<1x1x128xf32>
    %196 = vector.shape_cast %195 : vector<1x1x128xf32> to vector<1x128xf32>
    %197 = vector.shape_cast %194 : vector<1x128xf32> to vector<1x1x128xf32>
    tpu.vector_store %arg13[%c0_127, %c2_128, %c256_129], %197 {strides = array<i32>} : memref<1x4x1024xf32, #tpu.memory_space<vmem>>, vector<1x1x128xf32>,
    %198 = vector.extract_strided_slice %121 {offsets = [3, 256], sizes = [1, 128], strides = [1, 1]} : vector<8x512xf32> to vector<1x128xf32>
    %c0_130 = arith.constant 0 : index
    %c2_131 = arith.constant 2 : index
    %c384_132 = arith.constant 384 : index
    %199 = vector.load %arg13[%c0_130, %c2_131, %c384_132] : memref<1x4x1024xf32, #tpu.memory_space<vmem>>, vector<1x1x128xf32>
    %200 = vector.shape_cast %199 : vector<1x1x128xf32> to vector<1x128xf32>
    %201 = vector.shape_cast %198 : vector<1x128xf32> to vector<1x1x128xf32>
    tpu.vector_store %arg13[%c0_130, %c2_131, %c384_132], %201 {strides = array<i32>} : memref<1x4x1024xf32, #tpu.memory_space<vmem>>, vector<1x1x128xf32>,
    %202 = vector.extract_strided_slice %121 {offsets = [4, 256], sizes = [1, 128], strides = [1, 1]} : vector<8x512xf32> to vector<1x128xf32>
    %c0_133 = arith.constant 0 : index
    %c2_134 = arith.constant 2 : index
    %c512_135 = arith.constant 512 : index
    %203 = vector.load %arg13[%c0_133, %c2_134, %c512_135] : memref<1x4x1024xf32, #tpu.memory_space<vmem>>, vector<1x1x128xf32>
    %204 = vector.shape_cast %203 : vector<1x1x128xf32> to vector<1x128xf32>
    %205 = vector.shape_cast %202 : vector<1x128xf32> to vector<1x1x128xf32>
    tpu.vector_store %arg13[%c0_133, %c2_134, %c512_135], %205 {strides = array<i32>} : memref<1x4x1024xf32, #tpu.memory_space<vmem>>, vector<1x1x128xf32>,
    %206 = vector.extract_strided_slice %121 {offsets = [5, 256], sizes = [1, 128], strides = [1, 1]} : vector<8x512xf32> to vector<1x128xf32>
    %c0_136 = arith.constant 0 : index
    %c2_137 = arith.constant 2 : index
    %c640_138 = arith.constant 640 : index
    %207 = vector.load %arg13[%c0_136, %c2_137, %c640_138] : memref<1x4x1024xf32, #tpu.memory_space<vmem>>, vector<1x1x128xf32>
    %208 = vector.shape_cast %207 : vector<1x1x128xf32> to vector<1x128xf32>
    %209 = vector.shape_cast %206 : vector<1x128xf32> to vector<1x1x128xf32>
    tpu.vector_store %arg13[%c0_136, %c2_137, %c640_138], %209 {strides = array<i32>} : memref<1x4x1024xf32, #tpu.memory_space<vmem>>, vector<1x1x128xf32>,
    %210 = vector.extract_strided_slice %121 {offsets = [6, 256], sizes = [1, 128], strides = [1, 1]} : vector<8x512xf32> to vector<1x128xf32>
    %c0_139 = arith.constant 0 : index
    %c2_140 = arith.constant 2 : index
    %c768_141 = arith.constant 768 : index
    %211 = vector.load %arg13[%c0_139, %c2_140, %c768_141] : memref<1x4x1024xf32, #tpu.memory_space<vmem>>, vector<1x1x128xf32>
    %212 = vector.shape_cast %211 : vector<1x1x128xf32> to vector<1x128xf32>
    %213 = vector.shape_cast %210 : vector<1x128xf32> to vector<1x1x128xf32>
    tpu.vector_store %arg13[%c0_139, %c2_140, %c768_141], %213 {strides = array<i32>} : memref<1x4x1024xf32, #tpu.memory_space<vmem>>, vector<1x1x128xf32>,
    %214 = vector.extract_strided_slice %121 {offsets = [7, 256], sizes = [1, 128], strides = [1, 1]} : vector<8x512xf32> to vector<1x128xf32>
    %c0_142 = arith.constant 0 : index
    %c2_143 = arith.constant 2 : index
    %c896_144 = arith.constant 896 : index
    %215 = vector.load %arg13[%c0_142, %c2_143, %c896_144] : memref<1x4x1024xf32, #tpu.memory_space<vmem>>, vector<1x1x128xf32>
    %216 = vector.shape_cast %215 : vector<1x1x128xf32> to vector<1x128xf32>
    %217 = vector.shape_cast %214 : vector<1x128xf32> to vector<1x1x128xf32>
    tpu.vector_store %arg13[%c0_142, %c2_143, %c896_144], %217 {strides = array<i32>} : memref<1x4x1024xf32, #tpu.memory_space<vmem>>, vector<1x1x128xf32>,
    %218 = vector.extract_strided_slice %121 {offsets = [0, 384], sizes = [1, 128], strides = [1, 1]} : vector<8x512xf32> to vector<1x128xf32>
    %c0_145 = arith.constant 0 : index
    %c3_146 = arith.constant 3 : index
    %c0_147 = arith.constant 0 : index
    %219 = vector.load %arg13[%c0_145, %c3_146, %c0_147] : memref<1x4x1024xf32, #tpu.memory_space<vmem>>, vector<1x1x128xf32>
    %220 = vector.shape_cast %219 : vector<1x1x128xf32> to vector<1x128xf32>
    %221 = vector.shape_cast %218 : vector<1x128xf32> to vector<1x1x128xf32>
    tpu.vector_store %arg13[%c0_145, %c3_146, %c0_147], %221 {strides = array<i32>} : memref<1x4x1024xf32, #tpu.memory_space<vmem>>, vector<1x1x128xf32>,
    %222 = vector.extract_strided_slice %121 {offsets = [1, 384], sizes = [1, 128], strides = [1, 1]} : vector<8x512xf32> to vector<1x128xf32>
    %c0_148 = arith.constant 0 : index
    %c3_149 = arith.constant 3 : index
    %c128_150 = arith.constant 128 : index
    %223 = vector.load %arg13[%c0_148, %c3_149, %c128_150] : memref<1x4x1024xf32, #tpu.memory_space<vmem>>, vector<1x1x128xf32>
    %224 = vector.shape_cast %223 : vector<1x1x128xf32> to vector<1x128xf32>
    %225 = vector.shape_cast %222 : vector<1x128xf32> to vector<1x1x128xf32>
    tpu.vector_store %arg13[%c0_148, %c3_149, %c128_150], %225 {strides = array<i32>} : memref<1x4x1024xf32, #tpu.memory_space<vmem>>, vector<1x1x128xf32>,
    %226 = vector.extract_strided_slice %121 {offsets = [2, 384], sizes = [1, 128], strides = [1, 1]} : vector<8x512xf32> to vector<1x128xf32>
    %c0_151 = arith.constant 0 : index
    %c3_152 = arith.constant 3 : index
    %c256_153 = arith.constant 256 : index
    %227 = vector.load %arg13[%c0_151, %c3_152, %c256_153] : memref<1x4x1024xf32, #tpu.memory_space<vmem>>, vector<1x1x128xf32>
    %228 = vector.shape_cast %227 : vector<1x1x128xf32> to vector<1x128xf32>
    %229 = vector.shape_cast %226 : vector<1x128xf32> to vector<1x1x128xf32>
    tpu.vector_store %arg13[%c0_151, %c3_152, %c256_153], %229 {strides = array<i32>} : memref<1x4x1024xf32, #tpu.memory_space<vmem>>, vector<1x1x128xf32>,
    %230 = vector.extract_strided_slice %121 {offsets = [3, 384], sizes = [1, 128], strides = [1, 1]} : vector<8x512xf32> to vector<1x128xf32>
    %c0_154 = arith.constant 0 : index
    %c3_155 = arith.constant 3 : index
    %c384_156 = arith.constant 384 : index
    %231 = vector.load %arg13[%c0_154, %c3_155, %c384_156] : memref<1x4x1024xf32, #tpu.memory_space<vmem>>, vector<1x1x128xf32>
    %232 = vector.shape_cast %231 : vector<1x1x128xf32> to vector<1x128xf32>
    %233 = vector.shape_cast %230 : vector<1x128xf32> to vector<1x1x128xf32>
    tpu.vector_store %arg13[%c0_154, %c3_155, %c384_156], %233 {strides = array<i32>} : memref<1x4x1024xf32, #tpu.memory_space<vmem>>, vector<1x1x128xf32>,
    %234 = vector.extract_strided_slice %121 {offsets = [4, 384], sizes = [1, 128], strides = [1, 1]} : vector<8x512xf32> to vector<1x128xf32>
    %c0_157 = arith.constant 0 : index
    %c3_158 = arith.constant 3 : index
    %c512_159 = arith.constant 512 : index
    %235 = vector.load %arg13[%c0_157, %c3_158, %c512_159] : memref<1x4x1024xf32, #tpu.memory_space<vmem>>, vector<1x1x128xf32>
    %236 = vector.shape_cast %235 : vector<1x1x128xf32> to vector<1x128xf32>
    %237 = vector.shape_cast %234 : vector<1x128xf32> to vector<1x1x128xf32>
    tpu.vector_store %arg13[%c0_157, %c3_158, %c512_159], %237 {strides = array<i32>} : memref<1x4x1024xf32, #tpu.memory_space<vmem>>, vector<1x1x128xf32>,
    %238 = vector.extract_strided_slice %121 {offsets = [5, 384], sizes = [1, 128], strides = [1, 1]} : vector<8x512xf32> to vector<1x128xf32>
    %c0_160 = arith.constant 0 : index
    %c3_161 = arith.constant 3 : index
    %c640_162 = arith.constant 640 : index
    %239 = vector.load %arg13[%c0_160, %c3_161, %c640_162] : memref<1x4x1024xf32, #tpu.memory_space<vmem>>, vector<1x1x128xf32>
    %240 = vector.shape_cast %239 : vector<1x1x128xf32> to vector<1x128xf32>
    %241 = vector.shape_cast %238 : vector<1x128xf32> to vector<1x1x128xf32>
    tpu.vector_store %arg13[%c0_160, %c3_161, %c640_162], %241 {strides = array<i32>} : memref<1x4x1024xf32, #tpu.memory_space<vmem>>, vector<1x1x128xf32>,
    %242 = vector.extract_strided_slice %121 {offsets = [6, 384], sizes = [1, 128], strides = [1, 1]} : vector<8x512xf32> to vector<1x128xf32>
    %c0_163 = arith.constant 0 : index
    %c3_164 = arith.constant 3 : index
    %c768_165 = arith.constant 768 : index
    %243 = vector.load %arg13[%c0_163, %c3_164, %c768_165] : memref<1x4x1024xf32, #tpu.memory_space<vmem>>, vector<1x1x128xf32>
    %244 = vector.shape_cast %243 : vector<1x1x128xf32> to vector<1x128xf32>
    %245 = vector.shape_cast %242 : vector<1x128xf32> to vector<1x1x128xf32>
    tpu.vector_store %arg13[%c0_163, %c3_164, %c768_165], %245 {strides = array<i32>} : memref<1x4x1024xf32, #tpu.memory_space<vmem>>, vector<1x1x128xf32>,
    %246 = vector.extract_strided_slice %121 {offsets = [7, 384], sizes = [1, 128], strides = [1, 1]} : vector<8x512xf32> to vector<1x128xf32>
    %c0_166 = arith.constant 0 : index
    %c3_167 = arith.constant 3 : index
    %c896_168 = arith.constant 896 : index
    %247 = vector.load %arg13[%c0_166, %c3_167, %c896_168] : memref<1x4x1024xf32, #tpu.memory_space<vmem>>, vector<1x1x128xf32>
    %248 = vector.shape_cast %247 : vector<1x1x128xf32> to vector<1x128xf32>
    %249 = vector.shape_cast %246 : vector<1x128xf32> to vector<1x1x128xf32>
    tpu.vector_store %arg13[%c0_166, %c3_167, %c896_168], %249 {strides = array<i32>} : memref<1x4x1024xf32, #tpu.memory_space<vmem>>, vector<1x1x128xf32>,
    %c0_169 = arith.constant 0 : index
    %c0_170 = arith.constant 0 : index
    %c0_171 = arith.constant 0 : index
    %250 = vector.load %arg13[%c0_169, %c0_170, %c0_171] : memref<1x4x1024xf32, #tpu.memory_space<vmem>>, vector<1x4x1024xf32>
    %251 = vector.shape_cast %250 : vector<1x4x1024xf32> to vector<4x1024xf32>
    %c0_172 = arith.constant 0 : index
    %c0_173 = arith.constant 0 : index
    %252 = vector.load %arg9[%c0_172, %c0_173] : memref<1024x32xf32, #tpu.memory_space<vmem>>, vector<1024x32xf32>
    %cst_174 = arith.constant dense<0.000000e+00> : vector<4x32xf32>
    %253 = tpu.matmul %251, %252, %cst_174 {dimension_numbers = #tpu.dot_dimension_numbers<[1], [0], [0], [1], [0, 0, 1, 1], [], []>} : vector<4x1024xf32>, vector<1024x32xf32>, vector<4x32xf32> -> vector<4x32xf32>
    %c0_175 = arith.constant 0 : index
    %c0_176 = arith.constant 0 : index
    %254 = vector.load %arg10[%c0_175, %c0_176] : memref<1x32xf32, #tpu.memory_space<vmem>>, vector<1x32xf32>
    %255 = vector.broadcast %254 : vector<1x32xf32> to vector<4x32xf32>
    %256 = arith.addf %253, %255 : vector<4x32xf32>
    %cst_177 = arith.constant 0.000000e+00 : f32
    %257 = vector.broadcast %cst_177 : f32 to vector<4x32xf32>
    %258 = arith.maximumf %256, %257 : vector<4x32xf32>
    %c0_178 = arith.constant 0 : index
    %c0_179 = arith.constant 0 : index
    %c0_180 = arith.constant 0 : index
    %259 = vector.load %arg14[%c0_178, %c0_179, %c0_180] : memref<1x4x32xf32, #tpu.memory_space<vmem>>, vector<1x4x32xf32>
    %260 = vector.shape_cast %259 : vector<1x4x32xf32> to vector<4x32xf32>
    %261 = vector.shape_cast %258 : vector<4x32xf32> to vector<1x4x32xf32>
    tpu.vector_store %arg14[%c0_178, %c0_179, %c0_180], %261 {strides = array<i32>} : memref<1x4x32xf32, #tpu.memory_space<vmem>>, vector<1x4x32xf32>,
    %c0_181 = arith.constant 0 : index
    %c0_182 = arith.constant 0 : index
    %262 = vector.load %arg11[%c0_181, %c0_182] : memref<32x2xf32, #tpu.memory_space<vmem>>, vector<32x2xf32>
    %cst_183 = arith.constant dense<0.000000e+00> : vector<4x2xf32>
    %263 = tpu.matmul %258, %262, %cst_183 {dimension_numbers = #tpu.dot_dimension_numbers<[1], [0], [0], [1], [0, 0, 1, 1], [], []>} : vector<4x32xf32>, vector<32x2xf32>, vector<4x2xf32> -> vector<4x2xf32>
    %c0_184 = arith.constant 0 : index
    %c0_185 = arith.constant 0 : index
    %264 = vector.load %arg12[%c0_184, %c0_185] : memref<1x2xf32, #tpu.memory_space<vmem>>, vector<1x2xf32>
    %265 = vector.broadcast %264 : vector<1x2xf32> to vector<4x2xf32>
    %266 = arith.addf %263, %265 : vector<4x2xf32>
    %cst_186 = arith.constant 0.000000e+00 : f32
    %267 = vector.broadcast %cst_186 : f32 to vector<4x2xf32>
    %268 = arith.subf %267, %266 : vector<4x2xf32>
    %269 = math.exp %268 : vector<4x2xf32>
    %cst_187 = arith.constant 1.000000e+00 : f32
    %270 = vector.broadcast %cst_187 : f32 to vector<4x2xf32>
    %271 = arith.addf %270, %269 : vector<4x2xf32>
    %cst_188 = arith.constant 1.000000e+00 : f32
    %272 = vector.broadcast %cst_188 : f32 to vector<4x2xf32>
    %273 = arith.divf %272, %271 : vector<4x2xf32>
    %c0_189 = arith.constant 0 : index
    %c0_190 = arith.constant 0 : index
    %c0_191 = arith.constant 0 : index
    %274 = vector.load %arg15[%c0_189, %c0_190, %c0_191] : memref<1x4x2xf32, #tpu.memory_space<vmem>>, vector<1x4x2xf32>
    %275 = vector.shape_cast %274 : vector<1x4x2xf32> to vector<4x2xf32>
    %276 = vector.shape_cast %273 : vector<4x2xf32> to vector<1x4x2xf32>
    tpu.vector_store %arg15[%c0_189, %c0_190, %c0_191], %276 {strides = array<i32>} : memref<1x4x2xf32, #tpu.memory_space<vmem>>, vector<1x4x2xf32>,
    return
  }
  func.func @transform_0(%arg0: i32) -> (i32, i32, i32) {
    %c0_i32 = arith.constant 0 : i32
    %c0_i32_0 = arith.constant 0 : i32
    %c0_i32_1 = arith.constant 0 : i32
    return %arg0, %c0_i32, %c0_i32_0 : i32, i32, i32
  }
  func.func @transform_1(%arg0: i32) -> (i32, i32) {
    %c0_i32 = arith.constant 0 : i32
    %c0_i32_0 = arith.constant 0 : i32
    %c0_i32_1 = arith.constant 0 : i32
    return %c0_i32, %c0_i32_0 : i32, i32
  }
  func.func @transform_2(%arg0: i32) -> (i32, i32) {
    %c0_i32 = arith.constant 0 : i32
    %c0_i32_0 = arith.constant 0 : i32
    %c0_i32_1 = arith.constant 0 : i32
    return %c0_i32, %c0_i32_0 : i32, i32
  }
  func.func @transform_3(%arg0: i32) -> (i32, i32) {
    %c0_i32 = arith.constant 0 : i32
    %c0_i32_0 = arith.constant 0 : i32
    %c0_i32_1 = arith.constant 0 : i32
    return %c0_i32, %c0_i32_0 : i32, i32
  }
  func.func @transform_4(%arg0: i32) -> (i32, i32) {
    %c0_i32 = arith.constant 0 : i32
    %c0_i32_0 = arith.constant 0 : i32
    %c0_i32_1 = arith.constant 0 : i32
    return %c0_i32, %c0_i32_0 : i32, i32
  }
  func.func @transform_5(%arg0: i32) -> (i32, i32) {
    %c0_i32 = arith.constant 0 : i32
    %c0_i32_0 = arith.constant 0 : i32
    %c0_i32_1 = arith.constant 0 : i32
    return %c0_i32, %c0_i32_0 : i32, i32
  }
  func.func @transform_6(%arg0: i32) -> (i32, i32) {
    %c0_i32 = arith.constant 0 : i32
    %c0_i32_0 = arith.constant 0 : i32
    %c0_i32_1 = arith.constant 0 : i32
    return %c0_i32, %c0_i32_0 : i32, i32
  }
  func.func @transform_7(%arg0: i32) -> (i32, i32) {
    %c0_i32 = arith.constant 0 : i32
    %c0_i32_0 = arith.constant 0 : i32
    %c0_i32_1 = arith.constant 0 : i32
    return %c0_i32, %c0_i32_0 : i32, i32
  }
  func.func @transform_8(%arg0: i32) -> (i32, i32) {
    %c0_i32 = arith.constant 0 : i32
    %c0_i32_0 = arith.constant 0 : i32
    %c0_i32_1 = arith.constant 0 : i32
    return %c0_i32, %c0_i32_0 : i32, i32
  }
  func.func @transform_9(%arg0: i32) -> (i32, i32) {
    %c0_i32 = arith.constant 0 : i32
    %c0_i32_0 = arith.constant 0 : i32
    %c0_i32_1 = arith.constant 0 : i32
    return %c0_i32, %c0_i32_0 : i32, i32
  }
  func.func @transform_10(%arg0: i32) -> (i32, i32) {
    %c0_i32 = arith.constant 0 : i32
    %c0_i32_0 = arith.constant 0 : i32
    %c0_i32_1 = arith.constant 0 : i32
    return %c0_i32, %c0_i32_0 : i32, i32
  }
  func.func @transform_11(%arg0: i32) -> (i32, i32) {
    %c0_i32 = arith.constant 0 : i32
    %c0_i32_0 = arith.constant 0 : i32
    %c0_i32_1 = arith.constant 0 : i32
    return %c0_i32, %c0_i32_0 : i32, i32
  }
  func.func @transform_12(%arg0: i32) -> (i32, i32, i32) {
    %c0_i32 = arith.constant 0 : i32
    %c0_i32_0 = arith.constant 0 : i32
    %c0_i32_1 = arith.constant 0 : i32
    return %arg0, %c0_i32, %c0_i32_0 : i32, i32, i32
  }
  func.func @transform_13(%arg0: i32) -> (i32, i32, i32) {
    %c0_i32 = arith.constant 0 : i32
    %c0_i32_0 = arith.constant 0 : i32
    %c0_i32_1 = arith.constant 0 : i32
    return %arg0, %c0_i32, %c0_i32_0 : i32, i32, i32
  }
  func.func @transform_14(%arg0: i32) -> (i32, i32, i32) {
    %c0_i32 = arith.constant 0 : i32
    %c0_i32_0 = arith.constant 0 : i32
    %c0_i32_1 = arith.constant 0 : i32
    return %arg0, %c0_i32, %c0_i32_0 : i32, i32, i32
  }
}

</mosaic_0001>

<llo_original>
// kernel: side_layer_forward.1
$region0: #{side_layer_forward.1}
  #allocation0 [shape = 'u32[]', space=smem, size = 0x4, offset = 0x4, fixed_abs, tag = 'smem constant byte address 0x4 - core index']
  #allocation1 [shape = 'u32[72,128]{1,0:T(1,128)}', space=vmem, size = 0x9000, scoped, tag = 'internal scratch']
  #allocation2 [shape = 'f32[88,512]{1,0:T(8,128)}', space=vmem, size = 0x2c000, scoped, tag = 'scratch operand']
  %s0 = inlined_call_operand.vmem [shape: f32[8,4,128], index: 0, kind: input, shape index: {}]
  %s1 = inlined_call_operand.vmem [shape: f32[8,24], index: 1, kind: input, shape index: {}]
  %s2 = inlined_call_operand.vmem [shape: f32[8,1], index: 2, kind: input, shape index: {}]
  %s3 = inlined_call_operand.vmem [shape: f32[8,40], index: 3, kind: input, shape index: {}]
  %s4 = inlined_call_operand.vmem [shape: f32[8,1], index: 4, kind: input, shape index: {}]
  %s5 = inlined_call_operand.vmem [shape: f32[8,24], index: 5, kind: input, shape index: {}]
  %s6 = inlined_call_operand.vmem [shape: f32[8,48], index: 6, kind: input, shape index: {}]
  %s7 = inlined_call_operand.vmem [shape: f32[8,1], index: 7, kind: input, shape index: {}]
  %s8 = inlined_call_operand.vmem [shape: f32[1024,32], index: 8, kind: input, shape index: {}]
  %s9 = inlined_call_operand.vmem [shape: f32[1,32], index: 9, kind: input, shape index: {}]
  %s10 = inlined_call_operand.vmem [shape: f32[32,2], index: 10, kind: input, shape index: {}]
  %s11 = inlined_call_operand.vmem [shape: f32[1,2], index: 11, kind: input, shape index: {}]
  %s12 = inlined_call_operand.vmem [shape: f32[2,4,1024], index: 12, kind: output, shape index: {0}]
  %s13 = inlined_call_operand.hbm [shape: f32[2,4,32], index: 13, kind: output, shape index: {1}]
  %s14 = inlined_call_operand.vmem [shape: f32[2,4,2], index: 14, kind: output, shape index: {2}]
  %15 = xla_tuple %s12, %s13, %s14
  %s16 = sld [smem:[#allocation0]]
  $region97: #{side_layer_forward.1} parent=0
    _
  %s18 = ssub.s32 1, %s16
  %s19 = scalar_select 0, %s18, %s16
  $region1: #{side_layer_forward.1} parent=0
    #allocation3 [shape = 'u8[4096]{0}', space=vmem, size = 0x1000, scoped, tag = 'output window, operand 1']
    #allocation4 [shape = 's32[2]{0}', space=sflag, size = 0x8, scoped, tag = 'scoped memory for side_layer_forward.1']
    %20 = vsyncpa [#allocation4], 0
    %s21 = scalar_lea.sflag [#allocation4], 1
    %22 = vsyncpa %s21, 0
    loop: start=0, step=1, limit=4
    $region2: #{side_layer_forward.1} parent=1 // loop_pre_header
      _
    $region3: #{side_layer_forward.1} parent=1 // loop_header
      %s24 = sphi 0, %s28
      %p25 = scmp.ge.s32.totalorder %s24, 4
      %s34 = sphi 0, %s36
      %s37 = sphi 0, %s34
      %s38 = sphi 0, %s37
      %s54 = sphi 0, %s38
      %s58 = sphi 0, %s58
      %s60 = sphi 0, %s58
      %s61 = sphi 0, %s60
      %s75 = sphi 0, %s61
      %s79 = sphi 0, %s79
      %s81 = sphi 0, %s79
      %s82 = sphi 0, %s81
      %s96 = sphi 0, %s82
      %s100 = sphi 0, %s100
      %s102 = sphi 0, %s100
      %s103 = sphi 0, %s102
      %s117 = sphi 0, %s103
      %s121 = sphi 0, %s121
      %s123 = sphi 0, %s121
      %s124 = sphi 0, %s123
      %s138 = sphi 0, %s124
      %s142 = sphi 0, %s142
      %s144 = sphi 0, %s142
      %s145 = sphi 0, %s144
      %s159 = sphi 0, %s145
      %s163 = sphi 0, %s163
      %s165 = sphi 0, %s163
      %s166 = sphi 0, %s165
      %s180 = sphi 0, %s166
      %s184 = sphi 0, %s184
      %s186 = sphi 0, %s184
      %s187 = sphi 0, %s186
      %s201 = sphi 0, %s187
      %s205 = sphi 0, %s205
      %s207 = sphi 0, %s205
      %s208 = sphi 0, %s207
      %s222 = sphi 0, %s208
      %s226 = sphi 0, %s226
      %s228 = sphi 0, %s226
      %s229 = sphi 0, %s228
      %s243 = sphi 0, %s229
      %s247 = sphi 0, %s247
      %s249 = sphi 0, %s247
      %s250 = sphi 0, %s249
      %s264 = sphi 0, %s250
      %s268 = sphi 0, %s268
      %s270 = sphi 0, %s268
      %s271 = sphi 0, %s270
      %s285 = sphi 0, %s271
      %s291 = sphi 0, %s293
      %s294 = sphi 0, %s291
      %s295 = sphi 0, %s294
      %s311 = sphi 0, %s295
      %s317 = sphi 0, %s319
      %s320 = sphi 0, %s317
      %s321 = sphi 0, %s320
      %s337 = sphi 0, %s321
      %s343 = sphi 0, %s345
      %s346 = sphi 0, %s343
      %s347 = sphi 0, %s346
      %s363 = sphi 0, %s347
    $region4: #{side_layer_forward.1} parent=1 // loop_header_branch
      %27 = sbr.rel (%p25) target = $region8
    $region5: #{side_layer_forward.1} parent=1 // loop_body
      %s29 = ssub.s32 %s24, 1
      %s30 = ssub.s32 %s24, 2
      %s31 = sadd.s32 %s24, 1
      %s32 = ssub.s32 %s24, %s31
      %p33 = scmp.eq.s32.totalorder %s32, 0
      %s35 = sadd.s32 %s34, 1
      %s36 = scalar_select %p33, %s34, %s35
      %p39 = pneg %p33
      %p40 = scmp.eq.s32.totalorder %s24, 1
      %p41 = por %p39, %p40
      %p42 = scmp.ne.s32.totalorder %s34, %s37
      %p43 = scmp.eq.s32.totalorder %s24, 0
      %p44 = por %p42, %p43
      %p45 = scmp.ne.s32.totalorder %s34, %s37
      %p46 = scmp.eq.s32.totalorder %s29, 1
      %p47 = por %p45, %p46
      %p48 = scmp.ne.s32.totalorder %s37, %s38
      %p49 = scmp.eq.s32.totalorder %s29, 0
      %p50 = por %p48, %p49
      %p51 = scmp.ne.s32.totalorder %s37, %s38
      %p52 = scmp.eq.s32.totalorder %s30, 1
      %p53 = por %p51, %p52
      %p55 = scmp.ne.s32.totalorder %s38, %s54
      %p56 = scmp.eq.s32.totalorder %s30, 0
      %p57 = por %p55, %p56
      %s59 = sadd.s32 %s58, 1
      %p62 = scmp.eq.s32.totalorder %s24, 1
      %p63 = scmp.ne.s32.totalorder %s58, %s60
      %p64 = scmp.eq.s32.totalorder %s24, 0
      %p65 = por %p63, %p64
      %p66 = scmp.ne.s32.totalorder %s58, %s60
      %p67 = scmp.eq.s32.totalorder %s29, 1
      %p68 = por %p66, %p67
      %p69 = scmp.ne.s32.totalorder %s60, %s61
      %p70 = scmp.eq.s32.totalorder %s29, 0
      %p71 = por %p69, %p70
      %p72 = scmp.ne.s32.totalorder %s60, %s61
      %p73 = scmp.eq.s32.totalorder %s30, 1
      %p74 = por %p72, %p73
      %p76 = scmp.ne.s32.totalorder %s61, %s75
      %p77 = scmp.eq.s32.totalorder %s30, 0
      %p78 = por %p76, %p77
      %s80 = sadd.s32 %s79, 1
      %p83 = scmp.eq.s32.totalorder %s24, 1
      %p84 = scmp.ne.s32.totalorder %s79, %s81
      %p85 = scmp.eq.s32.totalorder %s24, 0
      %p86 = por %p84, %p85
      %p87 = scmp.ne.s32.totalorder %s79, %s81
      %p88 = scmp.eq.s32.totalorder %s29, 1
      %p89 = por %p87, %p88
      %p90 = scmp.ne.s32.totalorder %s81, %s82
      %p91 = scmp.eq.s32.totalorder %s29, 0
      %p92 = por %p90, %p91
      %p93 = scmp.ne.s32.totalorder %s81, %s82
      %p94 = scmp.eq.s32.totalorder %s30, 1
      %p95 = por %p93, %p94
      %p97 = scmp.ne.s32.totalorder %s82, %s96
      %p98 = scmp.eq.s32.totalorder %s30, 0
      %p99 = por %p97, %p98
      %s101 = sadd.s32 %s100, 1
      %p104 = scmp.eq.s32.totalorder %s24, 1
      %p105 = scmp.ne.s32.totalorder %s100, %s102
      %p106 = scmp.eq.s32.totalorder %s24, 0
      %p107 = por %p105, %p106
      %p108 = scmp.ne.s32.totalorder %s100, %s102
      %p109 = scmp.eq.s32.totalorder %s29, 1
      %p110 = por %p108, %p109
      %p111 = scmp.ne.s32.totalorder %s102, %s103
      %p112 = scmp.eq.s32.totalorder %s29, 0
      %p113 = por %p111, %p112
      %p114 = scmp.ne.s32.totalorder %s102, %s103
      %p115 = scmp.eq.s32.totalorder %s30, 1
      %p116 = por %p114, %p115
      %p118 = scmp.ne.s32.totalorder %s103, %s117
      %p119 = scmp.eq.s32.totalorder %s30, 0
      %p120 = por %p118, %p119
      %s122 = sadd.s32 %s121, 1
      %p125 = scmp.eq.s32.totalorder %s24, 1
      %p126 = scmp.ne.s32.totalorder %s121, %s123
      %p127 = scmp.eq.s32.totalorder %s24, 0
      %p128 = por %p126, %p127
      %p129 = scmp.ne.s32.totalorder %s121, %s123
      %p130 = scmp.eq.s32.totalorder %s29, 1
      %p131 = por %p129, %p130
      %p132 = scmp.ne.s32.totalorder %s123, %s124
      %p133 = scmp.eq.s32.totalorder %s29, 0
      %p134 = por %p132, %p133
      %p135 = scmp.ne.s32.totalorder %s123, %s124
      %p136 = scmp.eq.s32.totalorder %s30, 1
      %p137 = por %p135, %p136
      %p139 = scmp.ne.s32.totalorder %s124, %s138
      %p140 = scmp.eq.s32.totalorder %s30, 0
      %p141 = por %p139, %p140
      %s143 = sadd.s32 %s142, 1
      %p146 = scmp.eq.s32.totalorder %s24, 1
      %p147 = scmp.ne.s32.totalorder %s142, %s144
      %p148 = scmp.eq.s32.totalorder %s24, 0
      %p149 = por %p147, %p148
      %p150 = scmp.ne.s32.totalorder %s142, %s144
      %p151 = scmp.eq.s32.totalorder %s29, 1
      %p152 = por %p150, %p151
      %p153 = scmp.ne.s32.totalorder %s144, %s145
      %p154 = scmp.eq.s32.totalorder %s29, 0
      %p155 = por %p153, %p154
      %p156 = scmp.ne.s32.totalorder %s144, %s145
      %p157 = scmp.eq.s32.totalorder %s30, 1
      %p158 = por %p156, %p157
      %p160 = scmp.ne.s32.totalorder %s145, %s159
      %p161 = scmp.eq.s32.totalorder %s30, 0
      %p162 = por %p160, %p161
      %s164 = sadd.s32 %s163, 1
      %p167 = scmp.eq.s32.totalorder %s24, 1
      %p168 = scmp.ne.s32.totalorder %s163, %s165
      %p169 = scmp.eq.s32.totalorder %s24, 0
      %p170 = por %p168, %p169
      %p171 = scmp.ne.s32.totalorder %s163, %s165
      %p172 = scmp.eq.s32.totalorder %s29, 1
      %p173 = por %p171, %p172
      %p174 = scmp.ne.s32.totalorder %s165, %s166
      %p175 = scmp.eq.s32.totalorder %s29, 0
      %p176 = por %p174, %p175
      %p177 = scmp.ne.s32.totalorder %s165, %s166
      %p178 = scmp.eq.s32.totalorder %s30, 1
      %p179 = por %p177, %p178
      %p181 = scmp.ne.s32.totalorder %s166, %s180
      %p182 = scmp.eq.s32.totalorder %s30, 0
      %p183 = por %p181, %p182
      %s185 = sadd.s32 %s184, 1
      %p188 = scmp.eq.s32.totalorder %s24, 1
      %p189 = scmp.ne.s32.totalorder %s184, %s186
      %p190 = scmp.eq.s32.totalorder %s24, 0
      %p191 = por %p189, %p190
      %p192 = scmp.ne.s32.totalorder %s184, %s186
      %p193 = scmp.eq.s32.totalorder %s29, 1
      %p194 = por %p192, %p193
      %p195 = scmp.ne.s32.totalorder %s186, %s187
      %p196 = scmp.eq.s32.totalorder %s29, 0
      %p197 = por %p195, %p196
      %p198 = scmp.ne.s32.totalorder %s186, %s187
      %p199 = scmp.eq.s32.totalorder %s30, 1
      %p200 = por %p198, %p199
      %p202 = scmp.ne.s32.totalorder %s187, %s201
      %p203 = scmp.eq.s32.totalorder %s30, 0
      %p204 = por %p202, %p203
      %s206 = sadd.s32 %s205, 1
      %p209 = scmp.eq.s32.totalorder %s24, 1
      %p210 = scmp.ne.s32.totalorder %s205, %s207
      %p211 = scmp.eq.s32.totalorder %s24, 0
      %p212 = por %p210, %p211
      %p213 = scmp.ne.s32.totalorder %s205, %s207
      %p214 = scmp.eq.s32.totalorder %s29, 1
      %p215 = por %p213, %p214
      %p216 = scmp.ne.s32.totalorder %s207, %s208
      %p217 = scmp.eq.s32.totalorder %s29, 0
      %p218 = por %p216, %p217
      %p219 = scmp.ne.s32.totalorder %s207, %s208
      %p220 = scmp.eq.s32.totalorder %s30, 1
      %p221 = por %p219, %p220
      %p223 = scmp.ne.s32.totalorder %s208, %s222
      %p224 = scmp.eq.s32.totalorder %s30, 0
      %p225 = por %p223, %p224
      %s227 = sadd.s32 %s226, 1
      %p230 = scmp.eq.s32.totalorder %s24, 1
      %p231 = scmp.ne.s32.totalorder %s226, %s228
      %p232 = scmp.eq.s32.totalorder %s24, 0
      %p233 = por %p231, %p232
      %p234 = scmp.ne.s32.totalorder %s226, %s228
      %p235 = scmp.eq.s32.totalorder %s29, 1
      %p236 = por %p234, %p235
      %p237 = scmp.ne.s32.totalorder %s228, %s229
      %p238 = scmp.eq.s32.totalorder %s29, 0
      %p239 = por %p237, %p238
      %p240 = scmp.ne.s32.totalorder %s228, %s229
      %p241 = scmp.eq.s32.totalorder %s30, 1
      %p242 = por %p240, %p241
      %p244 = scmp.ne.s32.totalorder %s229, %s243
      %p245 = scmp.eq.s32.totalorder %s30, 0
      %p246 = por %p244, %p245
      %s248 = sadd.s32 %s247, 1
      %p251 = scmp.eq.s32.totalorder %s24, 1
      %p252 = scmp.ne.s32.totalorder %s247, %s249
      %p253 = scmp.eq.s32.totalorder %s24, 0
      %p254 = por %p252, %p253
      %p255 = scmp.ne.s32.totalorder %s247, %s249
      %p256 = scmp.eq.s32.totalorder %s29, 1
      %p257 = por %p255, %p256
      %p258 = scmp.ne.s32.totalorder %s249, %s250
      %p259 = scmp.eq.s32.totalorder %s29, 0
      %p260 = por %p258, %p259
      %p261 = scmp.ne.s32.totalorder %s249, %s250
      %p262 = scmp.eq.s32.totalorder %s30, 1
      %p263 = por %p261, %p262
      %p265 = scmp.ne.s32.totalorder %s250, %s264
      %p266 = scmp.eq.s32.totalorder %s30, 0
      %p267 = por %p265, %p266
      %s269 = sadd.s32 %s268, 1
      %p272 = scmp.eq.s32.totalorder %s24, 1
      %p273 = scmp.ne.s32.totalorder %s268, %s270
      %p274 = scmp.eq.s32.totalorder %s24, 0
      %p275 = por %p273, %p274
      %p276 = scmp.ne.s32.totalorder %s268, %s270
      %p277 = scmp.eq.s32.totalorder %s29, 1
      %p278 = por %p276, %p277
      %p279 = scmp.ne.s32.totalorder %s270, %s271
      %p280 = scmp.eq.s32.totalorder %s29, 0
      %p281 = por %p279, %p280
      %p282 = scmp.ne.s32.totalorder %s270, %s271
      %p283 = scmp.eq.s32.totalorder %s30, 1
      %p284 = por %p282, %p283
      %p286 = scmp.ne.s32.totalorder %s271, %s285
      %p287 = scmp.eq.s32.totalorder %s30, 0
      %p288 = por %p286, %p287
      %s289 = ssub.s32 %s24, %s31
      %p290 = scmp.eq.s32.totalorder %s289, 0
      %s292 = sadd.s32 %s291, 1
      %s293 = scalar_select %p290, %s291, %s292
      %p296 = pneg %p290
      %p297 = scmp.eq.s32.totalorder %s24, 1
      %p298 = por %p296, %p297
      %p299 = scmp.ne.s32.totalorder %s291, %s294
      %p300 = scmp.eq.s32.totalorder %s24, 0
      %p301 = por %p299, %p300
      %p302 = scmp.ne.s32.totalorder %s291, %s294
      %p303 = scmp.eq.s32.totalorder %s29, 1
      %p304 = por %p302, %p303
      %p305 = scmp.ne.s32.totalorder %s294, %s295
      %p306 = scmp.eq.s32.totalorder %s29, 0
      %p307 = por %p305, %p306
      %p308 = scmp.ne.s32.totalorder %s294, %s295
      %p309 = scmp.eq.s32.totalorder %s30, 1
      %p310 = por %p308, %p309
      %p312 = scmp.ne.s32.totalorder %s295, %s311
      %p313 = scmp.eq.s32.totalorder %s30, 0
      %p314 = por %p312, %p313
      %s315 = ssub.s32 %s24, %s31
      %p316 = scmp.eq.s32.totalorder %s315, 0
      %s318 = sadd.s32 %s317, 1
      %s319 = scalar_select %p316, %s317, %s318
      %p322 = pneg %p316
      %p323 = scmp.eq.s32.totalorder %s24, 1
      %p324 = por %p322, %p323
      %p325 = scmp.ne.s32.totalorder %s317, %s320
      %p326 = scmp.eq.s32.totalorder %s24, 0
      %p327 = por %p325, %p326
      %p328 = scmp.ne.s32.totalorder %s317, %s320
      %p329 = scmp.eq.s32.totalorder %s29, 1
      %p330 = por %p328, %p329
      %p331 = scmp.ne.s32.totalorder %s320, %s321
      %p332 = scmp.eq.s32.totalorder %s29, 0
      %p333 = por %p331, %p332
      %p334 = scmp.ne.s32.totalorder %s320, %s321
      %p335 = scmp.eq.s32.totalorder %s30, 1
      %p336 = por %p334, %p335
      %p338 = scmp.ne.s32.totalorder %s321, %s337
      %p339 = scmp.eq.s32.totalorder %s30, 0
      %p340 = por %p338, %p339
      %s341 = ssub.s32 %s24, %s31
      %p342 = scmp.eq.s32.totalorder %s341, 0
      %s344 = sadd.s32 %s343, 1
      %s345 = scalar_select %p342, %s343, %s344
      %p348 = pneg %p342
      %p349 = scmp.eq.s32.totalorder %s24, 1
      %p350 = por %p348, %p349
      %p351 = scmp.ne.s32.totalorder %s343, %s346
      %p352 = scmp.eq.s32.totalorder %s24, 0
      %p353 = por %p351, %p352
      %p354 = scmp.ne.s32.totalorder %s343, %s346
      %p355 = scmp.eq.s32.totalorder %s29, 1
      %p356 = por %p354, %p355
      %p357 = scmp.ne.s32.totalorder %s346, %s347
      %p358 = scmp.eq.s32.totalorder %s29, 0
      %p359 = por %p357, %p358
      %p360 = scmp.ne.s32.totalorder %s346, %s347
      %p361 = scmp.eq.s32.totalorder %s30, 1
      %p362 = por %p360, %p361
      %p364 = scmp.ne.s32.totalorder %s347, %s363
      %p365 = scmp.eq.s32.totalorder %s30, 0
      %p366 = por %p364, %p365
      %p367 = scmp.le.s32.totalorder 1, %s24
      %p368 = scmp.lt.s32.totalorder %s24, 3
      %p369 = pnand %p367, %p368
      %p370 = pneg %p369
      // Predicated region
      $region9: #{side_layer_forward.1} parent=5 // pred_check
        _
      $region10: #{side_layer_forward.1} parent=5 // pred_check_branch
        %372 = sbr.rel (%p369) target = $region12
      $region11: #{side_layer_forward.1} parent=5 // pred_region
        %s373 = ssub.s32 %s24, 1
        // Predicated region
        $region13: #{side_layer_forward.1} parent=11 // pred_check
          %p374 = pneg %p71
        $region14: #{side_layer_forward.1} parent=11 // pred_check_branch
          %376 = sbr.rel (%p374) target = $region16
        $region15: #{side_layer_forward.1} parent=11 // pred_region
          _
        $region16: #{side_layer_forward.1} parent=11 // pred_fallthru
          _
        // Predicated region
        $region17: #{side_layer_forward.1} parent=11 // pred_check
          %p377 = pneg %p92
        $region18: #{side_layer_forward.1} parent=11 // pred_check_branch
          %379 = sbr.rel (%p377) target = $region20
        $region19: #{side_layer_forward.1} parent=11 // pred_region
          _
        $region20: #{side_layer_forward.1} parent=11 // pred_fallthru
          _
        // Predicated region
        $region21: #{side_layer_forward.1} parent=11 // pred_check
          %p380 = pneg %p113
        $region22: #{side_layer_forward.1} parent=11 // pred_check_branch
          %382 = sbr.rel (%p380) target = $region24
        $region23: #{side_layer_forward.1} parent=11 // pred_region
          _
        $region24: #{side_layer_forward.1} parent=11 // pred_fallthru
          _
        // Predicated region
        $region25: #{side_layer_forward.1} parent=11 // pred_check
          %p383 = pneg %p134
        $region26: #{side_layer_forward.1} parent=11 // pred_check_branch
          %385 = sbr.rel (%p383) target = $region28
        $region27: #{side_layer_forward.1} parent=11 // pred_region
          _
        $region28: #{side_layer_forward.1} parent=11 // pred_fallthru
          _
        // Predicated region
        $region29: #{side_layer_forward.1} parent=11 // pred_check
          %p386 = pneg %p155
        $region30: #{side_layer_forward.1} parent=11 // pred_check_branch
          %388 = sbr.rel (%p386) target = $region32
        $region31: #{side_layer_forward.1} parent=11 // pred_region
          _
        $region32: #{side_layer_forward.1} parent=11 // pred_fallthru
          _
        // Predicated region
        $region33: #{side_layer_forward.1} parent=11 // pred_check
          %p389 = pneg %p176
        $region34: #{side_layer_forward.1} parent=11 // pred_check_branch
          %391 = sbr.rel (%p389) target = $region36
        $region35: #{side_layer_forward.1} parent=11 // pred_region
          _
        $region36: #{side_layer_forward.1} parent=11 // pred_fallthru
          _
        // Predicated region
        $region37: #{side_layer_forward.1} parent=11 // pred_check
          %p392 = pneg %p197
        $region38: #{side_layer_forward.1} parent=11 // pred_check_branch
          %394 = sbr.rel (%p392) target = $region40
        $region39: #{side_layer_forward.1} parent=11 // pred_region
          _
        $region40: #{side_layer_forward.1} parent=11 // pred_fallthru
          _
        // Predicated region
        $region41: #{side_layer_forward.1} parent=11 // pred_check
          %p395 = pneg %p218
        $region42: #{side_layer_forward.1} parent=11 // pred_check_branch
          %397 = sbr.rel (%p395) target = $region44
        $region43: #{side_layer_forward.1} parent=11 // pred_region
          _
        $region44: #{side_layer_forward.1} parent=11 // pred_fallthru
          _
        // Predicated region
        $region45: #{side_layer_forward.1} parent=11 // pred_check
          %p398 = pneg %p239
        $region46: #{side_layer_forward.1} parent=11 // pred_check_branch
          %400 = sbr.rel (%p398) target = $region48
        $region47: #{side_layer_forward.1} parent=11 // pred_region
          _
        $region48: #{side_layer_forward.1} parent=11 // pred_fallthru
          _
        // Predicated region
        $region49: #{side_layer_forward.1} parent=11 // pred_check
          %p401 = pneg %p260
        $region50: #{side_layer_forward.1} parent=11 // pred_check_branch
          %403 = sbr.rel (%p401) target = $region52
        $region51: #{side_layer_forward.1} parent=11 // pred_region
          _
        $region52: #{side_layer_forward.1} parent=11 // pred_fallthru
          _
        // Predicated region
        $region53: #{side_layer_forward.1} parent=11 // pred_check
          %p404 = pneg %p281
        $region54: #{side_layer_forward.1} parent=11 // pred_check_branch
          %406 = sbr.rel (%p404) target = $region56
        $region55: #{side_layer_forward.1} parent=11 // pred_region
          _
        $region56: #{side_layer_forward.1} parent=11 // pred_fallthru
          _
      $region12: #{side_layer_forward.1} parent=5 // pred_fallthru
        _
      %p407 = scmp.lt.s32.totalorder %s24, 2
      // Predicated region
      $region57: #{side_layer_forward.1} parent=5 // pred_check
        %p408 = pneg %p407
      $region58: #{side_layer_forward.1} parent=5 // pred_check_branch
        %410 = sbr.rel (%p408) target = $region60
      $region59: #{side_layer_forward.1} parent=5 // pred_region
        // Predicated region
        $region61: #{side_layer_forward.1} parent=59 // pred_check
          %p411 = pneg %p44
        $region62: #{side_layer_forward.1} parent=59 // pred_check_branch
          %413 = sbr.rel (%p411) target = $region64
        $region63: #{side_layer_forward.1} parent=59 // pred_region
          %s414 = smul.u32 4, %s24
          %p415 = scmp.lt.s32.totalorder %s414, 7
          %s416 = scalar_select %p415, %s414, 7
          %s417 = smul.addr %s416, 4
          %s418 = scalar_lea.vmem %s0, %s417
          %s419 = smul.u32 4, %s24
        $region64: #{side_layer_forward.1} parent=59 // pred_fallthru
          _
      $region60: #{side_layer_forward.1} parent=5 // pred_fallthru
        _
      %p420 = scmp.le.s32.totalorder 1, %s24
      %p421 = scmp.lt.s32.totalorder %s24, 3
      %p422 = pnand %p420, %p421
      %p423 = pneg %p422
      // Predicated region
      $region65: #{side_layer_forward.1} parent=5 // pred_check
        _
      $region66: #{side_layer_forward.1} parent=5 // pred_check_branch
        %425 = sbr.rel (%p422) target = $region68
      $region67: #{side_layer_forward.1} parent=5 // pred_region
        %s426 = ssub.s32 %s24, 1
        %s427 = smul.u32 4, %s29
        %p428 = scmp.lt.s32.totalorder %s427, 7
        %s429 = scalar_select %p428, %s427, 7
        %s430 = smul.addr %s429, 4
        %s431 = scalar_lea.vmem %s0, %s430
        %p432 = pneg %p50
        %p433 = pneg %p47
        %p434 = pneg %p71
        %p435 = pneg %p68
        %p436 = pneg %p92
        %p437 = pneg %p89
        %p438 = pneg %p113
        %p439 = pneg %p110
        %p440 = pneg %p134
        %p441 = pneg %p131
        %p442 = pneg %p155
        %p443 = pneg %p152
        %p444 = pneg %p176
        %p445 = pneg %p173
        %p446 = pneg %p197
        %p447 = pneg %p194
        %p448 = pneg %p218
        %p449 = pneg %p215
        %p450 = pneg %p239
        %p451 = pneg %p236
        %p452 = pneg %p260
        %p453 = pneg %p257
        %p454 = pneg %p281
        %p455 = pneg %p278
        %p456 = pneg %p307
        %p457 = pneg %p304
        %p458 = scmp.lt.s32.totalorder %s29, 1
        %s459 = scalar_select %p458, %s29, 1
        %s460 = smul.addr %s459, 8
        %s461 = smul.addr %s460, 4
        %s462 = scalar_lea.vmem %s12, %s461
        %p463 = pneg %p333
        %p464 = pneg %p330
        %s465 = sand.u32 %s320, 1
        %s466 = scalar_lea.sflag [#allocation4], %s465
        %s467 = sand.u32 %s320, 1
        %s468 = smul.addr %s467, 4
        %s469 = scalar_lea.vmem [#allocation3], %s468
        %p470 = pneg %p359
        %p471 = pneg %p356
        %p472 = scmp.lt.s32.totalorder %s29, 1
        %s473 = scalar_select %p472, %s29, 1
        %s474 = smul.addr %s473, 4
        %s475 = scalar_lea.vmem %s14, %s474
        %s476 = smul.u32 4, %s29
        %p477 = scmp.lt.s32.totalorder %s476, 7
        %s478 = scalar_select %p477, %s476, 7
        %s479 = smul.addr %s478, 4
        %s480 = scalar_lea.vmem %s0, %s479
        %s481 = smul.u32 4, %s29
        %p482 = scmp.lt.s32.totalorder %s29, 1
        %s483 = scalar_select %p482, %s29, 1
        %s484 = smul.addr %s483, 8
        %s485 = smul.addr %s484, 4
        %s486 = scalar_lea.vmem %s12, %s485
        %p487 = scmp.lt.s32.totalorder %s29, 1
        %s488 = scalar_select %p487, %s29, 1
        %s489 = smul.addr %s488, 4
        %s490 = scalar_lea.vmem %s14, %s489
        %491 = vst [vmem:[#allocation2] sm:$0xf0] 0.0
        %492 = vst [vmem:[#allocation2 + $0x8] sm:$0xf0] 0.0
        %493 = vst [vmem:[#allocation2 + $0x10] sm:$0xf0] 0.0
        %494 = vst [vmem:[#allocation2 + $0x18] sm:$0xf0] 0.0
        %495 = vst [vmem:[#allocation2 + $0x20] sm:$0xf0] 0.0
        %496 = vst [vmem:[#allocation2 + $0x28] sm:$0xf0] 0.0
        %497 = vst [vmem:[#allocation2 + $0x30] sm:$0xf0] 0.0
        %498 = vst [vmem:[#allocation2 + $0x38] sm:$0xf0] 0.0
        %499 = vst [vmem:[#allocation2 + $0x40] sm:$0xf0] 0.0
        %500 = vst [vmem:[#allocation2 + $0x48] sm:$0xf0] 0.0
        %501 = vst [vmem:[#allocation2 + $0x50] sm:$0xf0] 0.0
        %502 = vst [vmem:[#allocation2 + $0x58] sm:$0xf0] 0.0
        %503 = vst [vmem:[#allocation2 + $0x60] sm:$0xf0] 0.0
        %504 = vst [vmem:[#allocation2 + $0x68] sm:$0xf0] 0.0
        %505 = vst [vmem:[#allocation2 + $0x70] sm:$0xf0] 0.0
        %506 = vst [vmem:[#allocation2 + $0x78] sm:$0xf0] 0.0
        %507 = vst [vmem:[#allocation2 + $0x80] sm:$0xf0] 0.0
        %508 = vst [vmem:[#allocation2 + $0x88] sm:$0xf0] 0.0
        %509 = vst [vmem:[#allocation2 + $0x90] sm:$0xf0] 0.0
        %510 = vst [vmem:[#allocation2 + $0x98] sm:$0xf0] 0.0
        %v511 = vld [vmem:[%s480] sm:$0xf]
        %512 = vst [vmem:[#allocation2 + $0x40] sm:$0xf] %v511
        %s513 = scalar_lea.vmem %s480, 4
        %v514 = vld [vmem:[%s513] sm:$0xf]
        %515 = vst [vmem:[#allocation2 + $0x48] sm:$0xf] %v514
        %s516 = scalar_lea.vmem %s480, 8
        %v517 = vld [vmem:[%s516] sm:$0xf]
        %518 = vst [vmem:[#allocation2 + $0x50] sm:$0xf] %v517
        %s519 = scalar_lea.vmem %s480, 12
        %v520 = vld [vmem:[%s519] sm:$0xf]
        %521 = vst [vmem:[#allocation2 + $0x58] sm:$0xf] %v520
        %v522 = vld [vmem:[#allocation2 + $0x40] sm:$0xf]
        %v523 = vld [vmem:[#allocation2 + $0x48] sm:$0xf]
        %v524 = vld [vmem:[#allocation2 + $0x50] sm:$0xf]
        %v525 = vld [vmem:[#allocation2 + $0x58] sm:$0xf]
        %v526 = vlaneseq
        %v527 = vand.u32 %v526, 127
        %v528 = vadd.s32 %v527, 128
        %v529 = vadd.s32 %v527, 256
        %v530 = vadd.s32 %v527, 384
        %vm531 = vcmp.lt.s32.totalorder %v527, 0
        %v532 = vsub.s32 0, %v527
        %v533 = vsel %vm531, %v532, %v527
        %v534 = vshrl.u32 %v533, 7
        %v535 = vand.u32 %v533, 127
        %v536 = vsub.s32 0, %v535
        %v537 = vsel %vm531, %v536, %v535
        %vm538 = vcmp.lt.s32.totalorder %v528, 0
        %v539 = vsub.s32 0, %v528
        %v540 = vsel %vm538, %v539, %v528
        %v541 = vshrl.u32 %v540, 7
        %v542 = vand.u32 %v540, 127
        %v543 = vsub.s32 0, %v542
        %v544 = vsel %vm538, %v543, %v542
        %vm545 = vcmp.lt.s32.totalorder %v529, 0
        %v546 = vsub.s32 0, %v529
        %v547 = vsel %vm545, %v546, %v529
        %v548 = vshrl.u32 %v547, 7
        %v549 = vand.u32 %v547, 127
        %v550 = vsub.s32 0, %v549
        %v551 = vsel %vm545, %v550, %v549
        %vm552 = vcmp.lt.s32.totalorder %v530, 0
        %v553 = vsub.s32 0, %v530
        %v554 = vsel %vm552, %v553, %v530
        %v555 = vshrl.u32 %v554, 7
        %v556 = vand.u32 %v554, 127
        %v557 = vsub.s32 0, %v556
        %v558 = vsel %vm552, %v557, %v556
        %vm559 = vcmp.ne.s32.totalorder %v537, 0
        %vm560 = vcmp.ne.s32.totalorder %v544, 0
        %vm561 = vcmp.ne.s32.totalorder %v551, 0
        %vm562 = vcmp.ne.s32.totalorder %v558, 0
        %vm563 = vcmp.lt.s32.totalorder %v537, 0
        %vm564 = vcmp.lt.s32.totalorder %v544, 0
        %vm565 = vcmp.lt.s32.totalorder %v551, 0
        %vm566 = vcmp.lt.s32.totalorder %v558, 0
        %vm567 = vmand %vm563, %vm559
        %vm568 = vmand %vm564, %vm560
        %vm569 = vmand %vm565, %vm561
        %vm570 = vmand %vm566, %vm562
        %v571 = vadd.s32 %v537, 128
        %v572 = vadd.s32 %v544, 128
        %v573 = vadd.s32 %v551, 128
        %v574 = vadd.s32 %v558, 128
        %v575 = vsel %vm567, %v571, %v537
        %v576 = vsel %vm568, %v572, %v544
        %v577 = vsel %vm569, %v573, %v551
        %v578 = vsel %vm570, %v574, %v558
        %vm579 = vcmp.ge.s32.totalorder %v575, 2
        %vm580 = vcmp.ge.s32.totalorder %v576, 2
        %vm581 = vcmp.ge.s32.totalorder %v577, 2
        %vm582 = vcmp.ge.s32.totalorder %v578, 2
        %vm583 = vcmp.ge.s32.totalorder %v575, 1
        %vm584 = vcmp.ge.s32.totalorder %v576, 1
        %vm585 = vcmp.ge.s32.totalorder %v577, 1
        %vm586 = vcmp.ge.s32.totalorder %v578, 1
        %vm587 = vcmp.lt.s32.totalorder %v575, 127
        %vm588 = vcmp.lt.s32.totalorder %v576, 127
        %vm589 = vcmp.lt.s32.totalorder %v577, 127
        %vm590 = vcmp.lt.s32.totalorder %v578, 127
        %vm591 = vcmp.lt.s32.totalorder %v575, 126
        %vm592 = vcmp.lt.s32.totalorder %v576, 126
        %vm593 = vcmp.lt.s32.totalorder %v577, 126
        %vm594 = vcmp.lt.s32.totalorder %v578, 126
        %595 = vrot.lane.b32.xlu0 %v522, 2
        %v596 = vpop.permute.xlu0 %595
        %597 = vrot.lane.b32.xlu0 %v523, 2
        %v598 = vpop.permute.xlu0 %597
        %599 = vrot.lane.b32.xlu0 %v524, 2
        %v600 = vpop.permute.xlu0 %599
        %601 = vrot.lane.b32.xlu0 %v525, 2
        %v602 = vpop.permute.xlu0 %601
        %vm603 = vcmp.lt.s32.totalorder %v527, 2
        %v604 = vsel %vm603, %v600, %v602
        %v605 = vsel %vm603, %v598, %v600
        %v606 = vsel %vm603, %v596, %v598
        %v607 = vsel %vm603, %v602, %v596
        %v608 = vsel %vm579, 1, 0
        %v609 = vsel %vm580, 1, 0
        %v610 = vsel %vm581, 1, 0
        %v611 = vsel %vm582, 1, 0
        %vm612 = vcmp.eq.s32.totalorder %v608, 1
        %vm613 = vcmp.eq.s32.totalorder %v609, 1
        %vm614 = vcmp.eq.s32.totalorder %v610, 1
        %vm615 = vcmp.eq.s32.totalorder %v611, 1
        %v616 = vsel %vm612, %v607, 0.0
        %v617 = vsel %vm613, %v606, 0.0
        %v618 = vsel %vm614, %v605, 0.0
        %v619 = vsel %vm615, %v604, 0.0
        %620 = vst [vmem:[#allocation2] sm:$0xf] %v616
        %621 = vst [vmem:[#allocation2 + $0x8] sm:$0xf] %v617
        %622 = vst [vmem:[#allocation2 + $0x10] sm:$0xf] %v618
        %623 = vst [vmem:[#allocation2 + $0x18] sm:$0xf] %v619
        %624 = vrot.lane.b32.xlu0 %v522, 1
        %v625 = vpop.permute.xlu0 %624
        %626 = vrot.lane.b32.xlu0 %v523, 1
        %v627 = vpop.permute.xlu0 %626
        %628 = vrot.lane.b32.xlu0 %v524, 1
        %v629 = vpop.permute.xlu0 %628
        %630 = vrot.lane.b32.xlu0 %v525, 1
        %v631 = vpop.permute.xlu0 %630
        %vm632 = vcmp.lt.s32.totalorder %v527, 1
        %v633 = vsel %vm632, %v629, %v631
        %v634 = vsel %vm632, %v627, %v629
        %v635 = vsel %vm632, %v625, %v627
        %v636 = vsel %vm632, %v631, %v625
        %v637 = vsel %vm583, 1, 0
        %v638 = vsel %vm584, 1, 0
        %v639 = vsel %vm585, 1, 0
        %v640 = vsel %vm586, 1, 0
        %vm641 = vcmp.eq.s32.totalorder %v637, 1
        %vm642 = vcmp.eq.s32.totalorder %v638, 1
        %vm643 = vcmp.eq.s32.totalorder %v639, 1
        %vm644 = vcmp.eq.s32.totalorder %v640, 1
        %v645 = vsel %vm641, %v636, 0.0
        %v646 = vsel %vm642, %v635, 0.0
        %v647 = vsel %vm643, %v634, 0.0
        %v648 = vsel %vm644, %v633, 0.0
        %649 = vst [vmem:[#allocation2 + $0x20] sm:$0xf] %v645
        %650 = vst [vmem:[#allocation2 + $0x28] sm:$0xf] %v646
        %651 = vst [vmem:[#allocation2 + $0x30] sm:$0xf] %v647
        %652 = vst [vmem:[#allocation2 + $0x38] sm:$0xf] %v648
        %653 = vrot.lane.b32.xlu0 %v522, 127
        %v654 = vpop.permute.xlu0 %653
        %655 = vrot.lane.b32.xlu0 %v523, 127
        %v656 = vpop.permute.xlu0 %655
        %657 = vrot.lane.b32.xlu0 %v524, 127
        %v658 = vpop.permute.xlu0 %657
        %659 = vrot.lane.b32.xlu0 %v525, 127
        %v660 = vpop.permute.xlu0 %659
        %vm661 = vcmp.lt.s32.totalorder %v527, 127
        %v662 = vsel %vm661, %v658, %v660
        %v663 = vsel %vm661, %v656, %v658
        %v664 = vsel %vm661, %v654, %v656
        %v665 = vsel %vm661, %v660, %v654
        %v666 = vsel %vm587, 1, 0
        %v667 = vsel %vm588, 1, 0
        %v668 = vsel %vm589, 1, 0
        %v669 = vsel %vm590, 1, 0
        %vm670 = vcmp.eq.s32.totalorder %v666, 1
        %vm671 = vcmp.eq.s32.totalorder %v667, 1
        %vm672 = vcmp.eq.s32.totalorder %v668, 1
        %vm673 = vcmp.eq.s32.totalorder %v669, 1
        %v674 = vsel %vm670, %v664, 0.0
        %v675 = vsel %vm671, %v663, 0.0
        %v676 = vsel %vm672, %v662, 0.0
        %v677 = vsel %vm673, %v665, 0.0
        %678 = vst [vmem:[#allocation2 + $0x60] sm:$0xf] %v674
        %679 = vst [vmem:[#allocation2 + $0x68] sm:$0xf] %v675
        %680 = vst [vmem:[#allocation2 + $0x70] sm:$0xf] %v676
        %681 = vst [vmem:[#allocation2 + $0x78] sm:$0xf] %v677
        %682 = vrot.lane.b32.xlu0 %v522, 126
        %v683 = vpop.permute.xlu0 %682
        %684 = vrot.lane.b32.xlu0 %v523, 126
        %v685 = vpop.permute.xlu0 %684
        %686 = vrot.lane.b32.xlu0 %v524, 126
        %v687 = vpop.permute.xlu0 %686
        %688 = vrot.lane.b32.xlu0 %v525, 126
        %v689 = vpop.permute.xlu0 %688
        %vm690 = vcmp.lt.s32.totalorder %v527, 126
        %v691 = vsel %vm690, %v687, %v689
        %v692 = vsel %vm690, %v685, %v687
        %v693 = vsel %vm690, %v683, %v685
        %v694 = vsel %vm690, %v689, %v683
        %v695 = vsel %vm591, 1, 0
        %v696 = vsel %vm592, 1, 0
        %v697 = vsel %vm593, 1, 0
        %v698 = vsel %vm594, 1, 0
        %vm699 = vcmp.eq.s32.totalorder %v695, 1
        %vm700 = vcmp.eq.s32.totalorder %v696, 1
        %vm701 = vcmp.eq.s32.totalorder %v697, 1
        %vm702 = vcmp.eq.s32.totalorder %v698, 1
        %v703 = vsel %vm699, %v693, 0.0
        %v704 = vsel %vm700, %v692, 0.0
        %v705 = vsel %vm701, %v691, 0.0
        %v706 = vsel %vm702, %v694, 0.0
        %707 = vst [vmem:[#allocation2 + $0x80] sm:$0xf] %v703
        %708 = vst [vmem:[#allocation2 + $0x88] sm:$0xf] %v704
        %709 = vst [vmem:[#allocation2 + $0x90] sm:$0xf] %v705
        %710 = vst [vmem:[#allocation2 + $0x98] sm:$0xf] %v706
        %v711 = vld [vmem:[%s1] sm:$0xff]
        %v712 = vld [vmem:[#allocation2 + $0x20] sm:$0xff]
        %v713 = vld [vmem:[#allocation2 + $0x28] sm:$0xff]
        %v714 = vld [vmem:[#allocation2 + $0x30] sm:$0xff]
        %v715 = vld [vmem:[#allocation2 + $0x38] sm:$0xff]
        %v716 = vld [vmem:[#allocation2 + $0x40] sm:$0xff]
        %v717 = vld [vmem:[#allocation2 + $0x48] sm:$0xff]
        %v718 = vld [vmem:[#allocation2 + $0x50] sm:$0xff]
        %v719 = vld [vmem:[#allocation2 + $0x58] sm:$0xff]
        %v720 = vld [vmem:[#allocation2 + $0x60] sm:$0xff]
        %v721 = vld [vmem:[#allocation2 + $0x68] sm:$0xff]
        %v722 = vld [vmem:[#allocation2 + $0x70] sm:$0xff]
        %v723 = vld [vmem:[#allocation2 + $0x78] sm:$0xff]
        %v724 = vld [vmem:[%s2] sm:$0xff]
        %726 = vset.pattern.permute.xlu0 0
        %727 = vperm.xlu0 %726, %v724
        %v728 = vpop.permute.xlu0 %727
        %vm730 = vcmask 195584
        %v732 = vsel %vm730, %v711, 0
        %734 = vmatpush.msra.mxu0 0.0
        %735 = vmatpush.msra.mxu0 0.0
        %736 = vmatpush.msra.mxu0 0.0
        %737 = vmatpush.msra.mxu0 0.0
        %738 = vmatpush.msra.mxu0 0.0
        %739 = vmatpush.msra.mxu0 0.0
        %740 = vmatpush.msra.mxu0 0.0
        %741 = vmatpush.msra.mxu0 0.0
        %742 = vmatpush.msra.mxu0 0.0
        %743 = vmatpush.msra.mxu0 0.0
        %744 = vmatpush.msra.mxu0 0.0
        %745 = vmatpush.msra.mxu0 0.0
        %746 = vmatpush.msra.mxu0 0.0
        %747 = vmatpush.msra.mxu0 %v720
        %748 = vmatpush.msra.mxu0 %v716
        %749 = vmatpush.msra.mxu0 %v712
        %750 = vmatmul.f32.gmra.mxu0 %v732
        %v751 = vpop.f32.mrf.mxu0
        %v752 = vadd.f32 %v728, %v751
        %753 = vdwg.mxu0
        %754 = vmatpush.msra.mxu0 0.0
        %755 = vmatpush.msra.mxu0 0.0
        %756 = vmatpush.msra.mxu0 0.0
        %757 = vmatpush.msra.mxu0 0.0
        %758 = vmatpush.msra.mxu0 0.0
        %759 = vmatpush.msra.mxu0 0.0
        %760 = vmatpush.msra.mxu0 0.0
        %761 = vmatpush.msra.mxu0 0.0
        %762 = vmatpush.msra.mxu0 0.0
        %763 = vmatpush.msra.mxu0 0.0
        %764 = vmatpush.msra.mxu0 0.0
        %765 = vmatpush.msra.mxu0 0.0
        %766 = vmatpush.msra.mxu0 0.0
        %767 = vmatpush.msra.mxu0 %v721
        %768 = vmatpush.msra.mxu0 %v717
        %769 = vmatpush.msra.mxu0 %v713
        %770 = vmatmul.f32.gmra.mxu0 %v732
        %v771 = vpop.f32.mrf.mxu0
        %v772 = vadd.f32 %v728, %v771
        %773 = vdwg.mxu0
        %774 = vmatpush.msra.mxu0 0.0
        %775 = vmatpush.msra.mxu0 0.0
        %776 = vmatpush.msra.mxu0 0.0
        %777 = vmatpush.msra.mxu0 0.0
        %778 = vmatpush.msra.mxu0 0.0
        %779 = vmatpush.msra.mxu0 0.0
        %780 = vmatpush.msra.mxu0 0.0
        %781 = vmatpush.msra.mxu0 0.0
        %782 = vmatpush.msra.mxu0 0.0
        %783 = vmatpush.msra.mxu0 0.0
        %784 = vmatpush.msra.mxu0 0.0
        %785 = vmatpush.msra.mxu0 0.0
        %786 = vmatpush.msra.mxu0 0.0
        %787 = vmatpush.msra.mxu0 %v722
        %788 = vmatpush.msra.mxu0 %v718
        %789 = vmatpush.msra.mxu0 %v714
        %790 = vmatmul.f32.gmra.mxu0 %v732
        %v791 = vpop.f32.mrf.mxu0
        %v792 = vadd.f32 %v728, %v791
        %793 = vdwg.mxu0
        %794 = vmatpush.msra.mxu0 0.0
        %795 = vmatpush.msra.mxu0 0.0
        %796 = vmatpush.msra.mxu0 0.0
        %797 = vmatpush.msra.mxu0 0.0
        %798 = vmatpush.msra.mxu0 0.0
        %799 = vmatpush.msra.mxu0 0.0
        %800 = vmatpush.msra.mxu0 0.0
        %801 = vmatpush.msra.mxu0 0.0
        %802 = vmatpush.msra.mxu0 0.0
        %803 = vmatpush.msra.mxu0 0.0
        %804 = vmatpush.msra.mxu0 0.0
        %805 = vmatpush.msra.mxu0 0.0
        %806 = vmatpush.msra.mxu0 0.0
        %807 = vmatpush.msra.mxu0 %v723
        %808 = vmatpush.msra.mxu0 %v719
        %809 = vmatpush.msra.mxu0 %v715
        %810 = vmatmul.f32.gmra.mxu0 %v732
        %v811 = vpop.f32.mrf.mxu0
        %v812 = vadd.f32 %v728, %v811
        %813 = vdwg.mxu0
        %v814 = vmax.f32 %v752, 0.0
        %v815 = vmax.f32 %v772, 0.0
        %v816 = vmax.f32 %v792, 0.0
        %v817 = vmax.f32 %v812, 0.0
        %818 = vrot.lane.b32.xlu0 %v814, 1
        %v819 = vpop.permute.xlu0 %818
        %820 = vrot.lane.b32.xlu0 %v815, 1
        %v821 = vpop.permute.xlu0 %820
        %822 = vrot.lane.b32.xlu0 %v816, 1
        %v823 = vpop.permute.xlu0 %822
        %824 = vrot.lane.b32.xlu0 %v817, 1
        %v825 = vpop.permute.xlu0 %824
        %v826 = vsel %vm632, %v823, %v825
        %v827 = vsel %vm632, %v821, %v823
        %v828 = vsel %vm632, %v819, %v821
        %v829 = vsel %vm632, %v825, %v819
        %v830 = vsel %vm641, %v829, 0.0
        %v831 = vsel %vm642, %v828, 0.0
        %v832 = vsel %vm643, %v827, 0.0
        %v833 = vsel %vm644, %v826, 0.0
        %834 = vst [vmem:[#allocation2 + $0xa0] sm:$0xff] %v830
        %835 = vst [vmem:[#allocation2 + $0xa8] sm:$0xff] %v831
        %836 = vst [vmem:[#allocation2 + $0xb0] sm:$0xff] %v832
        %837 = vst [vmem:[#allocation2 + $0xb8] sm:$0xff] %v833
        %838 = vst [vmem:[#allocation2 + $0xc0] sm:$0xff] %v814
        %839 = vst [vmem:[#allocation2 + $0xc8] sm:$0xff] %v815
        %840 = vst [vmem:[#allocation2 + $0xd0] sm:$0xff] %v816
        %841 = vst [vmem:[#allocation2 + $0xd8] sm:$0xff] %v817
        %842 = vrot.lane.b32.xlu0 %v814, 127
        %v843 = vpop.permute.xlu0 %842
        %844 = vrot.lane.b32.xlu0 %v815, 127
        %v845 = vpop.permute.xlu0 %844
        %846 = vrot.lane.b32.xlu0 %v816, 127
        %v847 = vpop.permute.xlu0 %846
        %848 = vrot.lane.b32.xlu0 %v817, 127
        %v849 = vpop.permute.xlu0 %848
        %v850 = vsel %vm661, %v847, %v849
        %v851 = vsel %vm661, %v845, %v847
        %v852 = vsel %vm661, %v843, %v845
        %v853 = vsel %vm661, %v849, %v843
        %v854 = vsel %vm670, %v852, 0.0
        %v855 = vsel %vm671, %v851, 0.0
        %v856 = vsel %vm672, %v850, 0.0
        %v857 = vsel %vm673, %v853, 0.0
        %858 = vst [vmem:[#allocation2 + $0xe0] sm:$0xff] %v854
        %859 = vst [vmem:[#allocation2 + $0xe8] sm:$0xff] %v855
        %860 = vst [vmem:[#allocation2 + $0xf0] sm:$0xff] %v856
        %861 = vst [vmem:[#allocation2 + $0xf8] sm:$0xff] %v857
        %v862 = vld [vmem:[%s3] sm:$0xff]
        %v863 = vld [vmem:[#allocation2] sm:$0xff]
        %v864 = vld [vmem:[#allocation2 + $0x8] sm:$0xff]
        %v865 = vld [vmem:[#allocation2 + $0x10] sm:$0xff]
        %v866 = vld [vmem:[#allocation2 + $0x18] sm:$0xff]
        %v867 = vld [vmem:[#allocation2 + $0x20] sm:$0xff]
        %v868 = vld [vmem:[#allocation2 + $0x28] sm:$0xff]
        %v869 = vld [vmem:[#allocation2 + $0x30] sm:$0xff]
        %v870 = vld [vmem:[#allocation2 + $0x38] sm:$0xff]
        %v871 = vld [vmem:[#allocation2 + $0x40] sm:$0xff]
        %v872 = vld [vmem:[#allocation2 + $0x48] sm:$0xff]
        %v873 = vld [vmem:[#allocation2 + $0x50] sm:$0xff]
        %v874 = vld [vmem:[#allocation2 + $0x58] sm:$0xff]
        %v875 = vld [vmem:[#allocation2 + $0x60] sm:$0xff]
        %v876 = vld [vmem:[#allocation2 + $0x68] sm:$0xff]
        %v877 = vld [vmem:[#allocation2 + $0x70] sm:$0xff]
        %v878 = vld [vmem:[#allocation2 + $0x78] sm:$0xff]
        %v879 = vld [vmem:[#allocation2 + $0x80] sm:$0xff]
        %v880 = vld [vmem:[#allocation2 + $0x88] sm:$0xff]
        %v881 = vld [vmem:[#allocation2 + $0x90] sm:$0xff]
        %v882 = vld [vmem:[#allocation2 + $0x98] sm:$0xff]
        %v883 = vld [vmem:[%s4] sm:$0xff]
        %885 = vset.pattern.permute.xlu0 0
        %886 = vperm.xlu0 %885, %v883
        %v887 = vpop.permute.xlu0 %886
        %vm889 = vcmask 326656
        %v891 = vsel %vm889, %v862, 0
        %893 = vmatpush.msra.mxu0 0.0
        %894 = vmatpush.msra.mxu0 0.0
        %895 = vmatpush.msra.mxu0 0.0
        %896 = vmatpush.msra.mxu0 0.0
        %897 = vmatpush.msra.mxu0 0.0
        %898 = vmatpush.msra.mxu0 0.0
        %899 = vmatpush.msra.mxu0 0.0
        %900 = vmatpush.msra.mxu0 0.0
        %901 = vmatpush.msra.mxu0 0.0
        %902 = vmatpush.msra.mxu0 0.0
        %903 = vmatpush.msra.mxu0 0.0
        %904 = vmatpush.msra.mxu0 %v879
        %905 = vmatpush.msra.mxu0 %v875
        %906 = vmatpush.msra.mxu0 %v871
        %907 = vmatpush.msra.mxu0 %v867
        %908 = vmatpush.msra.mxu0 %v863
        %909 = vmatmul.f32.gmra.mxu0 %v891
        %v910 = vpop.f32.mrf.mxu0
        %v911 = vadd.f32 %v887, %v910
        %912 = vdwg.mxu0
        %913 = vmatpush.msra.mxu0 0.0
        %914 = vmatpush.msra.mxu0 0.0
        %915 = vmatpush.msra.mxu0 0.0
        %916 = vmatpush.msra.mxu0 0.0
        %917 = vmatpush.msra.mxu0 0.0
        %918 = vmatpush.msra.mxu0 0.0
        %919 = vmatpush.msra.mxu0 0.0
        %920 = vmatpush.msra.mxu0 0.0
        %921 = vmatpush.msra.mxu0 0.0
        %922 = vmatpush.msra.mxu0 0.0
        %923 = vmatpush.msra.mxu0 0.0
        %924 = vmatpush.msra.mxu0 %v880
        %925 = vmatpush.msra.mxu0 %v876
        %926 = vmatpush.msra.mxu0 %v872
        %927 = vmatpush.msra.mxu0 %v868
        %928 = vmatpush.msra.mxu0 %v864
        %929 = vmatmul.f32.gmra.mxu0 %v891
        %v930 = vpop.f32.mrf.mxu0
        %v931 = vadd.f32 %v887, %v930
        %932 = vdwg.mxu0
        %933 = vmatpush.msra.mxu0 0.0
        %934 = vmatpush.msra.mxu0 0.0
        %935 = vmatpush.msra.mxu0 0.0
        %936 = vmatpush.msra.mxu0 0.0
        %937 = vmatpush.msra.mxu0 0.0
        %938 = vmatpush.msra.mxu0 0.0
        %939 = vmatpush.msra.mxu0 0.0
        %940 = vmatpush.msra.mxu0 0.0
        %941 = vmatpush.msra.mxu0 0.0
        %942 = vmatpush.msra.mxu0 0.0
        %943 = vmatpush.msra.mxu0 0.0
        %944 = vmatpush.msra.mxu0 %v881
        %945 = vmatpush.msra.mxu0 %v877
        %946 = vmatpush.msra.mxu0 %v873
        %947 = vmatpush.msra.mxu0 %v869
        %948 = vmatpush.msra.mxu0 %v865
        %949 = vmatmul.f32.gmra.mxu0 %v891
        %v950 = vpop.f32.mrf.mxu0
        %v951 = vadd.f32 %v887, %v950
        %952 = vdwg.mxu0
        %953 = vmatpush.msra.mxu0 0.0
        %954 = vmatpush.msra.mxu0 0.0
        %955 = vmatpush.msra.mxu0 0.0
        %956 = vmatpush.msra.mxu0 0.0
        %957 = vmatpush.msra.mxu0 0.0
        %958 = vmatpush.msra.mxu0 0.0
        %959 = vmatpush.msra.mxu0 0.0
        %960 = vmatpush.msra.mxu0 0.0
        %961 = vmatpush.msra.mxu0 0.0
        %962 = vmatpush.msra.mxu0 0.0
        %963 = vmatpush.msra.mxu0 0.0
        %964 = vmatpush.msra.mxu0 %v882
        %965 = vmatpush.msra.mxu0 %v878
        %966 = vmatpush.msra.mxu0 %v874
        %967 = vmatpush.msra.mxu0 %v870
        %968 = vmatpush.msra.mxu0 %v866
        %969 = vmatmul.f32.gmra.mxu0 %v891
        %v970 = vpop.f32.mrf.mxu0
        %v971 = vadd.f32 %v887, %v970
        %972 = vdwg.mxu0
        %v973 = vmax.f32 %v911, 0.0
        %v974 = vmax.f32 %v931, 0.0
        %v975 = vmax.f32 %v951, 0.0
        %v976 = vmax.f32 %v971, 0.0
        %977 = vrot.lane.b32.xlu0 %v973, 1
        %v978 = vpop.permute.xlu0 %977
        %979 = vrot.lane.b32.xlu0 %v974, 1
        %v980 = vpop.permute.xlu0 %979
        %981 = vrot.lane.b32.xlu0 %v975, 1
        %v982 = vpop.permute.xlu0 %981
        %983 = vrot.lane.b32.xlu0 %v976, 1
        %v984 = vpop.permute.xlu0 %983
        %v985 = vsel %vm632, %v982, %v984
        %v986 = vsel %vm632, %v980, %v982
        %v987 = vsel %vm632, %v978, %v980
        %v988 = vsel %vm632, %v984, %v978
        %v989 = vsel %vm641, %v988, 0.0
        %v990 = vsel %vm642, %v987, 0.0
        %v991 = vsel %vm643, %v986, 0.0
        %v992 = vsel %vm644, %v985, 0.0
        %993 = vst [vmem:[#allocation2 + $0x100] sm:$0xff] %v989
        %994 = vst [vmem:[#allocation2 + $0x108] sm:$0xff] %v990
        %995 = vst [vmem:[#allocation2 + $0x110] sm:$0xff] %v991
        %996 = vst [vmem:[#allocation2 + $0x118] sm:$0xff] %v992
        %997 = vst [vmem:[#allocation2 + $0x120] sm:$0xff] %v973
        %998 = vst [vmem:[#allocation2 + $0x128] sm:$0xff] %v974
        %999 = vst [vmem:[#allocation2 + $0x130] sm:$0xff] %v975
        %1000 = vst [vmem:[#allocation2 + $0x138] sm:$0xff] %v976
        %1001 = vrot.lane.b32.xlu0 %v973, 127
        %v1002 = vpop.permute.xlu0 %1001
        %1003 = vrot.lane.b32.xlu0 %v974, 127
        %v1004 = vpop.permute.xlu0 %1003
        %1005 = vrot.lane.b32.xlu0 %v975, 127
        %v1006 = vpop.permute.xlu0 %1005
        %1007 = vrot.lane.b32.xlu0 %v976, 127
        %v1008 = vpop.permute.xlu0 %1007
        %v1009 = vsel %vm661, %v1006, %v1008
        %v1010 = vsel %vm661, %v1004, %v1006
        %v1011 = vsel %vm661, %v1002, %v1004
        %v1012 = vsel %vm661, %v1008, %v1002
        %v1013 = vsel %vm670, %v1011, 0.0
        %v1014 = vsel %vm671, %v1010, 0.0
        %v1015 = vsel %vm672, %v1009, 0.0
        %v1016 = vsel %vm673, %v1012, 0.0
        %1017 = vst [vmem:[#allocation2 + $0x140] sm:$0xff] %v1013
        %1018 = vst [vmem:[#allocation2 + $0x148] sm:$0xff] %v1014
        %1019 = vst [vmem:[#allocation2 + $0x150] sm:$0xff] %v1015
        %1020 = vst [vmem:[#allocation2 + $0x158] sm:$0xff] %v1016
        %v1021 = vld [vmem:[%s5] sm:$0xff]
        %v1022 = vld [vmem:[#allocation2 + $0x20] sm:$0xff]
        %v1023 = vld [vmem:[#allocation2 + $0x28] sm:$0xff]
        %v1024 = vld [vmem:[#allocation2 + $0x30] sm:$0xff]
        %v1025 = vld [vmem:[#allocation2 + $0x38] sm:$0xff]
        %v1026 = vld [vmem:[#allocation2 + $0x40] sm:$0xff]
        %v1027 = vld [vmem:[#allocation2 + $0x48] sm:$0xff]
        %v1028 = vld [vmem:[#allocation2 + $0x50] sm:$0xff]
        %v1029 = vld [vmem:[#allocation2 + $0x58] sm:$0xff]
        %v1030 = vld [vmem:[#allocation2 + $0x60] sm:$0xff]
        %v1031 = vld [vmem:[#allocation2 + $0x68] sm:$0xff]
        %v1032 = vld [vmem:[#allocation2 + $0x70] sm:$0xff]
        %v1033 = vld [vmem:[#allocation2 + $0x78] sm:$0xff]
        %v1034 = vld [vmem:[%s6] sm:$0xff]
        %v1035 = vld [vmem:[#allocation2 + $0xa0] sm:$0xff]
        %v1036 = vld [vmem:[#allocation2 + $0xa8] sm:$0xff]
        %v1037 = vld [vmem:[#allocation2 + $0xb0] sm:$0xff]
        %v1038 = vld [vmem:[#allocation2 + $0xb8] sm:$0xff]
        %v1039 = vld [vmem:[#allocation2 + $0xc0] sm:$0xff]
        %v1040 = vld [vmem:[#allocation2 + $0xc8] sm:$0xff]
        %v1041 = vld [vmem:[#allocation2 + $0xd0] sm:$0xff]
        %v1042 = vld [vmem:[#allocation2 + $0xd8] sm:$0xff]
        %v1043 = vld [vmem:[#allocation2 + $0xe0] sm:$0xff]
        %v1044 = vld [vmem:[#allocation2 + $0xe8] sm:$0xff]
        %v1045 = vld [vmem:[#allocation2 + $0xf0] sm:$0xff]
        %v1046 = vld [vmem:[#allocation2 + $0xf8] sm:$0xff]
        %v1047 = vld [vmem:[#allocation2 + $0x100] sm:$0xff]
        %v1048 = vld [vmem:[#allocation2 + $0x108] sm:$0xff]
        %v1049 = vld [vmem:[#allocation2 + $0x110] sm:$0xff]
        %v1050 = vld [vmem:[#allocation2 + $0x118] sm:$0xff]
        %v1051 = vld [vmem:[#allocation2 + $0x120] sm:$0xff]
        %v1052 = vld [vmem:[#allocation2 + $0x128] sm:$0xff]
        %v1053 = vld [vmem:[#allocation2 + $0x130] sm:$0xff]
        %v1054 = vld [vmem:[#allocation2 + $0x138] sm:$0xff]
        %v1055 = vld [vmem:[#allocation2 + $0x140] sm:$0xff]
        %v1056 = vld [vmem:[#allocation2 + $0x148] sm:$0xff]
        %v1057 = vld [vmem:[#allocation2 + $0x150] sm:$0xff]
        %v1058 = vld [vmem:[#allocation2 + $0x158] sm:$0xff]
        %vm1059 = vcmask 392192
        %v1061 = vsel %vm1059, %v1034, 0
        %1063 = vmatpush.msra.mxu0 0.0
        %1064 = vmatpush.msra.mxu0 0.0
        %1065 = vmatpush.msra.mxu0 0.0
        %1066 = vmatpush.msra.mxu0 0.0
        %1067 = vmatpush.msra.mxu0 0.0
        %1068 = vmatpush.msra.mxu0 0.0
        %1069 = vmatpush.msra.mxu0 0.0
        %1070 = vmatpush.msra.mxu0 0.0
        %1071 = vmatpush.msra.mxu0 0.0
        %1072 = vmatpush.msra.mxu0 0.0
        %1073 = vmatpush.msra.mxu0 %v1055
        %1074 = vmatpush.msra.mxu0 %v1051
        %1075 = vmatpush.msra.mxu0 %v1047
        %1076 = vmatpush.msra.mxu0 %v1043
        %1077 = vmatpush.msra.mxu0 %v1039
        %1078 = vmatpush.msra.mxu0 %v1035
        %1079 = vmatmul.f32.gmra.mxu0 %v1061
        %v1080 = vpop.f32.mrf.mxu0
        %v1081 = vadd.f32 0.0, %v1080
        %1082 = vdwg.mxu0
        %1083 = vmatpush.msra.mxu0 0.0
        %1084 = vmatpush.msra.mxu0 0.0
        %1085 = vmatpush.msra.mxu0 0.0
        %1086 = vmatpush.msra.mxu0 0.0
        %1087 = vmatpush.msra.mxu0 0.0
        %1088 = vmatpush.msra.mxu0 0.0
        %1089 = vmatpush.msra.mxu0 0.0
        %1090 = vmatpush.msra.mxu0 0.0
        %1091 = vmatpush.msra.mxu0 0.0
        %1092 = vmatpush.msra.mxu0 0.0
        %1093 = vmatpush.msra.mxu0 %v1056
        %1094 = vmatpush.msra.mxu0 %v1052
        %1095 = vmatpush.msra.mxu0 %v1048
        %1096 = vmatpush.msra.mxu0 %v1044
        %1097 = vmatpush.msra.mxu0 %v1040
        %1098 = vmatpush.msra.mxu0 %v1036
        %1099 = vmatmul.f32.gmra.mxu0 %v1061
        %v1100 = vpop.f32.mrf.mxu0
        %v1101 = vadd.f32 0.0, %v1100
        %1102 = vdwg.mxu0
        %1103 = vmatpush.msra.mxu0 0.0
        %1104 = vmatpush.msra.mxu0 0.0
        %1105 = vmatpush.msra.mxu0 0.0
        %1106 = vmatpush.msra.mxu0 0.0
        %1107 = vmatpush.msra.mxu0 0.0
        %1108 = vmatpush.msra.mxu0 0.0
        %1109 = vmatpush.msra.mxu0 0.0
        %1110 = vmatpush.msra.mxu0 0.0
        %1111 = vmatpush.msra.mxu0 0.0
        %1112 = vmatpush.msra.mxu0 0.0
        %1113 = vmatpush.msra.mxu0 %v1057
        %1114 = vmatpush.msra.mxu0 %v1053
        %1115 = vmatpush.msra.mxu0 %v1049
        %1116 = vmatpush.msra.mxu0 %v1045
        %1117 = vmatpush.msra.mxu0 %v1041
        %1118 = vmatpush.msra.mxu0 %v1037
        %1119 = vmatmul.f32.gmra.mxu0 %v1061
        %v1120 = vpop.f32.mrf.mxu0
        %v1121 = vadd.f32 0.0, %v1120
        %1122 = vdwg.mxu0
        %1123 = vmatpush.msra.mxu0 0.0
        %1124 = vmatpush.msra.mxu0 0.0
        %1125 = vmatpush.msra.mxu0 0.0
        %1126 = vmatpush.msra.mxu0 0.0
        %1127 = vmatpush.msra.mxu0 0.0
        %1128 = vmatpush.msra.mxu0 0.0
        %1129 = vmatpush.msra.mxu0 0.0
        %1130 = vmatpush.msra.mxu0 0.0
        %1131 = vmatpush.msra.mxu0 0.0
        %1132 = vmatpush.msra.mxu0 0.0
        %1133 = vmatpush.msra.mxu0 %v1058
        %1134 = vmatpush.msra.mxu0 %v1054
        %1135 = vmatpush.msra.mxu0 %v1050
        %1136 = vmatpush.msra.mxu0 %v1046
        %1137 = vmatpush.msra.mxu0 %v1042
        %1138 = vmatpush.msra.mxu0 %v1038
        %1139 = vmatmul.f32.gmra.mxu0 %v1061
        %v1140 = vpop.f32.mrf.mxu0
        %v1141 = vadd.f32 0.0, %v1140
        %1142 = vdwg.mxu0
        %v1144 = vsel %vm730, %v1021, 0
        %1146 = vmatpush.msra.mxu0 0.0
        %1147 = vmatpush.msra.mxu0 0.0
        %1148 = vmatpush.msra.mxu0 0.0
        %1149 = vmatpush.msra.mxu0 0.0
        %1150 = vmatpush.msra.mxu0 0.0
        %1151 = vmatpush.msra.mxu0 0.0
        %1152 = vmatpush.msra.mxu0 0.0
        %1153 = vmatpush.msra.mxu0 0.0
        %1154 = vmatpush.msra.mxu0 0.0
        %1155 = vmatpush.msra.mxu0 0.0
        %1156 = vmatpush.msra.mxu0 0.0
        %1157 = vmatpush.msra.mxu0 0.0
        %1158 = vmatpush.msra.mxu0 0.0
        %1159 = vmatpush.msra.mxu0 %v1030
        %1160 = vmatpush.msra.mxu0 %v1026
        %1161 = vmatpush.msra.mxu0 %v1022
        %1162 = vmatmul.f32.gmra.mxu0 %v1144
        %v1163 = vpop.f32.mrf.mxu0
        %v1164 = vadd.f32 %v1081, %v1163
        %1165 = vdwg.mxu0
        %1166 = vmatpush.msra.mxu0 0.0
        %1167 = vmatpush.msra.mxu0 0.0
        %1168 = vmatpush.msra.mxu0 0.0
        %1169 = vmatpush.msra.mxu0 0.0
        %1170 = vmatpush.msra.mxu0 0.0
        %1171 = vmatpush.msra.mxu0 0.0
        %1172 = vmatpush.msra.mxu0 0.0
        %1173 = vmatpush.msra.mxu0 0.0
        %1174 = vmatpush.msra.mxu0 0.0
        %1175 = vmatpush.msra.mxu0 0.0
        %1176 = vmatpush.msra.mxu0 0.0
        %1177 = vmatpush.msra.mxu0 0.0
        %1178 = vmatpush.msra.mxu0 0.0
        %1179 = vmatpush.msra.mxu0 %v1031
        %1180 = vmatpush.msra.mxu0 %v1027
        %1181 = vmatpush.msra.mxu0 %v1023
        %1182 = vmatmul.f32.gmra.mxu0 %v1144
        %v1183 = vpop.f32.mrf.mxu0
        %v1184 = vadd.f32 %v1101, %v1183
        %1185 = vdwg.mxu0
        %1186 = vmatpush.msra.mxu0 0.0
        %1187 = vmatpush.msra.mxu0 0.0
        %1188 = vmatpush.msra.mxu0 0.0
        %1189 = vmatpush.msra.mxu0 0.0
        %1190 = vmatpush.msra.mxu0 0.0
        %1191 = vmatpush.msra.mxu0 0.0
        %1192 = vmatpush.msra.mxu0 0.0
        %1193 = vmatpush.msra.mxu0 0.0
        %1194 = vmatpush.msra.mxu0 0.0
        %1195 = vmatpush.msra.mxu0 0.0
        %1196 = vmatpush.msra.mxu0 0.0
        %1197 = vmatpush.msra.mxu0 0.0
        %1198 = vmatpush.msra.mxu0 0.0
        %1199 = vmatpush.msra.mxu0 %v1032
        %1200 = vmatpush.msra.mxu0 %v1028
        %1201 = vmatpush.msra.mxu0 %v1024
        %1202 = vmatmul.f32.gmra.mxu0 %v1144
        %v1203 = vpop.f32.mrf.mxu0
        %v1204 = vadd.f32 %v1121, %v1203
        %1205 = vdwg.mxu0
        %1206 = vmatpush.msra.mxu0 0.0
        %1207 = vmatpush.msra.mxu0 0.0
        %1208 = vmatpush.msra.mxu0 0.0
        %1209 = vmatpush.msra.mxu0 0.0
        %1210 = vmatpush.msra.mxu0 0.0
        %1211 = vmatpush.msra.mxu0 0.0
        %1212 = vmatpush.msra.mxu0 0.0
        %1213 = vmatpush.msra.mxu0 0.0
        %1214 = vmatpush.msra.mxu0 0.0
        %1215 = vmatpush.msra.mxu0 0.0
        %1216 = vmatpush.msra.mxu0 0.0
        %1217 = vmatpush.msra.mxu0 0.0
        %1218 = vmatpush.msra.mxu0 0.0
        %1219 = vmatpush.msra.mxu0 %v1033
        %1220 = vmatpush.msra.mxu0 %v1029
        %1221 = vmatpush.msra.mxu0 %v1025
        %1222 = vmatmul.f32.gmra.mxu0 %v1144
        %v1223 = vpop.f32.mrf.mxu0
        %v1224 = vadd.f32 %v1141, %v1223
        %1225 = vdwg.mxu0
        %v1226 = vld [vmem:[%s7] sm:$0xff]
        %1228 = vset.pattern.permute.xlu0 0
        %1229 = vperm.xlu0 %1228, %v1226
        %v1230 = vpop.permute.xlu0 %1229
        %v1232 = vadd.f32 %v1164, %v1230
        %v1233 = vadd.f32 %v1184, %v1230
        %v1234 = vadd.f32 %v1204, %v1230
        %v1235 = vadd.f32 %v1224, %v1230
        %v1236 = vmax.f32 %v1232, 0.0
        %v1237 = vmax.f32 %v1233, 0.0
        %v1238 = vmax.f32 %v1234, 0.0
        %v1239 = vmax.f32 %v1235, 0.0
        %1240 = vst [vmem:[%s486] sm:$0x1] %v1236
        %v1242 = vrot.slane %v1236, 5
        %v1243 = vrot.slane %v1242, 4
        %1245 = vst [vmem:[%s486 + $0x4] sm:$0x1] %v1243
        %v1246 = vrot.slane %v1236, 6
        %v1247 = vrot.slane %v1246, 4
        %1249 = vst [vmem:[%s486 + $0x8] sm:$0x1] %v1247
        %v1250 = vrot.slane %v1236, 7
        %v1251 = vrot.slane %v1250, 4
        %1253 = vst [vmem:[%s486 + $0xc] sm:$0x1] %v1251
        %1254 = vst.sshfl [vmem:[#allocation1] sm:$0xff pattern:$0x75316420] %v1236
        %s1255 = scalar_lea.vmem [#allocation1], 1
        %v1256 = vld [vmem:[%s1255] ss:$2 sm:$0xff]
        %1258 = vst [vmem:[%s486 + $0x10] sm:$0x1] %v1256
        %1259 = vst.sshfl [vmem:[#allocation1] sm:$0xff pattern:$0x75316420] %v1236
        %s1260 = scalar_lea.vmem [#allocation1], 1
        %v1261 = vld [vmem:[%s1260] ss:$2 sm:$0xff]
        %v1262 = vrot.slane %v1261, 5
        %v1263 = vrot.slane %v1262, 4
        %1265 = vst [vmem:[%s486 + $0x14] sm:$0x1] %v1263
        %1266 = vst.sshfl [vmem:[#allocation1] sm:$0xff pattern:$0x75316420] %v1236
        %s1267 = scalar_lea.vmem [#allocation1], 1
        %v1268 = vld [vmem:[%s1267] ss:$2 sm:$0xff]
        %v1269 = vrot.slane %v1268, 6
        %v1270 = vrot.slane %v1269, 4
        %1272 = vst [vmem:[%s486 + $0x18] sm:$0x1] %v1270
        %1273 = vst.sshfl [vmem:[#allocation1] sm:$0xff pattern:$0x75316420] %v1236
        %s1274 = scalar_lea.vmem [#allocation1], 1
        %v1275 = vld [vmem:[%s1274] ss:$2 sm:$0xff]
        %v1276 = vrot.slane %v1275, 7
        %v1277 = vrot.slane %v1276, 4
        %1279 = vst [vmem:[%s486 + $0x1c] sm:$0x1] %v1277
        %1280 = vst [vmem:[%s486 + $0x1] sm:$0x1] %v1237
        %v1282 = vrot.slane %v1237, 5
        %v1283 = vrot.slane %v1282, 4
        %1285 = vst [vmem:[%s486 + $0x5] sm:$0x1] %v1283
        %v1286 = vrot.slane %v1237, 6
        %v1287 = vrot.slane %v1286, 4
        %1289 = vst [vmem:[%s486 + $0x9] sm:$0x1] %v1287
        %v1290 = vrot.slane %v1237, 7
        %v1291 = vrot.slane %v1290, 4
        %1293 = vst [vmem:[%s486 + $0xd] sm:$0x1] %v1291
        %1294 = vst.sshfl [vmem:[#allocation1] sm:$0xff pattern:$0x75316420] %v1237
        %s1295 = scalar_lea.vmem [#allocation1], 1
        %v1296 = vld [vmem:[%s1295] ss:$2 sm:$0xff]
        %1298 = vst [vmem:[%s486 + $0x11] sm:$0x1] %v1296
        %1299 = vst.sshfl [vmem:[#allocation1] sm:$0xff pattern:$0x75316420] %v1237
        %s1300 = scalar_lea.vmem [#allocation1], 1
        %v1301 = vld [vmem:[%s1300] ss:$2 sm:$0xff]
        %v1302 = vrot.slane %v1301, 5
        %v1303 = vrot.slane %v1302, 4
        %1305 = vst [vmem:[%s486 + $0x15] sm:$0x1] %v1303
        %1306 = vst.sshfl [vmem:[#allocation1] sm:$0xff pattern:$0x75316420] %v1237
        %s1307 = scalar_lea.vmem [#allocation1], 1
        %v1308 = vld [vmem:[%s1307] ss:$2 sm:$0xff]
        %v1309 = vrot.slane %v1308, 6
        %v1310 = vrot.slane %v1309, 4
        %1312 = vst [vmem:[%s486 + $0x19] sm:$0x1] %v1310
        %1313 = vst.sshfl [vmem:[#allocation1] sm:$0xff pattern:$0x75316420] %v1237
        %s1314 = scalar_lea.vmem [#allocation1], 1
        %v1315 = vld [vmem:[%s1314] ss:$2 sm:$0xff]
        %v1316 = vrot.slane %v1315, 7
        %v1317 = vrot.slane %v1316, 4
        %1319 = vst [vmem:[%s486 + $0x1d] sm:$0x1] %v1317
        %1320 = vst [vmem:[%s486 + $0x2] sm:$0x1] %v1238
        %v1322 = vrot.slane %v1238, 5
        %v1323 = vrot.slane %v1322, 4
        %1325 = vst [vmem:[%s486 + $0x6] sm:$0x1] %v1323
        %v1326 = vrot.slane %v1238, 6
        %v1327 = vrot.slane %v1326, 4
        %1329 = vst [vmem:[%s486 + $0xa] sm:$0x1] %v1327
        %v1330 = vrot.slane %v1238, 7
        %v1331 = vrot.slane %v1330, 4
        %1333 = vst [vmem:[%s486 + $0xe] sm:$0x1] %v1331
        %1334 = vst.sshfl [vmem:[#allocation1] sm:$0xff pattern:$0x75316420] %v1238
        %s1335 = scalar_lea.vmem [#allocation1], 1
        %v1336 = vld [vmem:[%s1335] ss:$2 sm:$0xff]
        %1338 = vst [vmem:[%s486 + $0x12] sm:$0x1] %v1336
        %1339 = vst.sshfl [vmem:[#allocation1] sm:$0xff pattern:$0x75316420] %v1238
        %s1340 = scalar_lea.vmem [#allocation1], 1
        %v1341 = vld [vmem:[%s1340] ss:$2 sm:$0xff]
        %v1342 = vrot.slane %v1341, 5
        %v1343 = vrot.slane %v1342, 4
        %1345 = vst [vmem:[%s486 + $0x16] sm:$0x1] %v1343
        %1346 = vst.sshfl [vmem:[#allocation1] sm:$0xff pattern:$0x75316420] %v1238
        %s1347 = scalar_lea.vmem [#allocation1], 1
        %v1348 = vld [vmem:[%s1347] ss:$2 sm:$0xff]
        %v1349 = vrot.slane %v1348, 6
        %v1350 = vrot.slane %v1349, 4
        %1352 = vst [vmem:[%s486 + $0x1a] sm:$0x1] %v1350
        %1353 = vst.sshfl [vmem:[#allocation1] sm:$0xff pattern:$0x75316420] %v1238
        %s1354 = scalar_lea.vmem [#allocation1], 1
        %v1355 = vld [vmem:[%s1354] ss:$2 sm:$0xff]
        %v1356 = vrot.slane %v1355, 7
        %v1357 = vrot.slane %v1356, 4
        %1359 = vst [vmem:[%s486 + $0x1e] sm:$0x1] %v1357
        %1360 = vst [vmem:[%s486 + $0x3] sm:$0x1] %v1239
        %v1362 = vrot.slane %v1239, 5
        %v1363 = vrot.slane %v1362, 4
        %1365 = vst [vmem:[%s486 + $0x7] sm:$0x1] %v1363
        %v1366 = vrot.slane %v1239, 6
        %v1367 = vrot.slane %v1366, 4
        %1369 = vst [vmem:[%s486 + $0xb] sm:$0x1] %v1367
        %v1370 = vrot.slane %v1239, 7
        %v1371 = vrot.slane %v1370, 4
        %1373 = vst [vmem:[%s486 + $0xf] sm:$0x1] %v1371
        %1374 = vst.sshfl [vmem:[#allocation1] sm:$0xff pattern:$0x75316420] %v1239
        %s1375 = scalar_lea.vmem [#allocation1], 1
        %v1376 = vld [vmem:[%s1375] ss:$2 sm:$0xff]
        %1378 = vst [vmem:[%s486 + $0x13] sm:$0x1] %v1376
        %1379 = vst.sshfl [vmem:[#allocation1] sm:$0xff pattern:$0x75316420] %v1239
        %s1380 = scalar_lea.vmem [#allocation1], 1
        %v1381 = vld [vmem:[%s1380] ss:$2 sm:$0xff]
        %v1382 = vrot.slane %v1381, 5
        %v1383 = vrot.slane %v1382, 4
        %1385 = vst [vmem:[%s486 + $0x17] sm:$0x1] %v1383
        %1386 = vst.sshfl [vmem:[#allocation1] sm:$0xff pattern:$0x75316420] %v1239
        %s1387 = scalar_lea.vmem [#allocation1], 1
        %v1388 = vld [vmem:[%s1387] ss:$2 sm:$0xff]
        %v1389 = vrot.slane %v1388, 6
        %v1390 = vrot.slane %v1389, 4
        %1392 = vst [vmem:[%s486 + $0x1b] sm:$0x1] %v1390
        %1393 = vst.sshfl [vmem:[#allocation1] sm:$0xff pattern:$0x75316420] %v1239
        %s1394 = scalar_lea.vmem [#allocation1], 1
        %v1395 = vld [vmem:[%s1394] ss:$2 sm:$0xff]
        %v1396 = vrot.slane %v1395, 7
        %v1397 = vrot.slane %v1396, 4
        %1399 = vst [vmem:[%s486 + $0x1f] sm:$0x1] %v1397
        %v1400 = vld [vmem:[%s486] sm:$0xff]
        %v1401 = vld [vmem:[%s486 + $0x8] sm:$0xff]
        %v1402 = vld [vmem:[%s486 + $0x10] sm:$0xff]
        %v1403 = vld [vmem:[%s486 + $0x18] sm:$0xff]
        %v1404 = vld [vmem:[%s8] sm:$0xff]
        %v1405 = vld [vmem:[%s8 + $0x8] sm:$0xff]
        %v1406 = vld [vmem:[%s8 + $0x10] sm:$0xff]
        %v1407 = vld [vmem:[%s8 + $0x18] sm:$0xff]
        %v1408 = vld [vmem:[%s8 + $0x20] sm:$0xff]
        %v1409 = vld [vmem:[%s8 + $0x28] sm:$0xff]
        %v1410 = vld [vmem:[%s8 + $0x30] sm:$0xff]
        %v1411 = vld [vmem:[%s8 + $0x38] sm:$0xff]
        %v1412 = vld [vmem:[%s8 + $0x40] sm:$0xff]
        %v1413 = vld [vmem:[%s8 + $0x48] sm:$0xff]
        %v1414 = vld [vmem:[%s8 + $0x50] sm:$0xff]
        %v1415 = vld [vmem:[%s8 + $0x58] sm:$0xff]
        %v1416 = vld [vmem:[%s8 + $0x60] sm:$0xff]
        %v1417 = vld [vmem:[%s8 + $0x68] sm:$0xff]
        %v1418 = vld [vmem:[%s8 + $0x70] sm:$0xff]
        %v1419 = vld [vmem:[%s8 + $0x78] sm:$0xff]
        %v1420 = vld [vmem:[%s8 + $0x80] sm:$0xff]
        %v1421 = vld [vmem:[%s8 + $0x88] sm:$0xff]
        %v1422 = vld [vmem:[%s8 + $0x90] sm:$0xff]
        %v1423 = vld [vmem:[%s8 + $0x98] sm:$0xff]
        %v1424 = vld [vmem:[%s8 + $0xa0] sm:$0xff]
        %v1425 = vld [vmem:[%s8 + $0xa8] sm:$0xff]
        %v1426 = vld [vmem:[%s8 + $0xb0] sm:$0xff]
        %v1427 = vld [vmem:[%s8 + $0xb8] sm:$0xff]
        %v1428 = vld [vmem:[%s8 + $0xc0] sm:$0xff]
        %v1429 = vld [vmem:[%s8 + $0xc8] sm:$0xff]
        %v1430 = vld [vmem:[%s8 + $0xd0] sm:$0xff]
        %v1431 = vld [vmem:[%s8 + $0xd8] sm:$0xff]
        %v1432 = vld [vmem:[%s8 + $0xe0] sm:$0xff]
        %v1433 = vld [vmem:[%s8 + $0xe8] sm:$0xff]
        %v1434 = vld [vmem:[%s8 + $0xf0] sm:$0xff]
        %v1435 = vld [vmem:[%s8 + $0xf8] sm:$0xff]
        %v1436 = vld [vmem:[%s8 + $0x100] sm:$0xff]
        %v1437 = vld [vmem:[%s8 + $0x108] sm:$0xff]
        %v1438 = vld [vmem:[%s8 + $0x110] sm:$0xff]
        %v1439 = vld [vmem:[%s8 + $0x118] sm:$0xff]
        %v1440 = vld [vmem:[%s8 + $0x120] sm:$0xff]
        %v1441 = vld [vmem:[%s8 + $0x128] sm:$0xff]
        %v1442 = vld [vmem:[%s8 + $0x130] sm:$0xff]
        %v1443 = vld [vmem:[%s8 + $0x138] sm:$0xff]
        %v1444 = vld [vmem:[%s8 + $0x140] sm:$0xff]
        %v1445 = vld [vmem:[%s8 + $0x148] sm:$0xff]
        %v1446 = vld [vmem:[%s8 + $0x150] sm:$0xff]
        %v1447 = vld [vmem:[%s8 + $0x158] sm:$0xff]
        %v1448 = vld [vmem:[%s8 + $0x160] sm:$0xff]
        %v1449 = vld [vmem:[%s8 + $0x168] sm:$0xff]
        %v1450 = vld [vmem:[%s8 + $0x170] sm:$0xff]
        %v1451 = vld [vmem:[%s8 + $0x178] sm:$0xff]
        %v1452 = vld [vmem:[%s8 + $0x180] sm:$0xff]
        %v1453 = vld [vmem:[%s8 + $0x188] sm:$0xff]
        %v1454 = vld [vmem:[%s8 + $0x190] sm:$0xff]
        %v1455 = vld [vmem:[%s8 + $0x198] sm:$0xff]
        %v1456 = vld [vmem:[%s8 + $0x1a0] sm:$0xff]
        %v1457 = vld [vmem:[%s8 + $0x1a8] sm:$0xff]
        %v1458 = vld [vmem:[%s8 + $0x1b0] sm:$0xff]
        %v1459 = vld [vmem:[%s8 + $0x1b8] sm:$0xff]
        %v1460 = vld [vmem:[%s8 + $0x1c0] sm:$0xff]
        %v1461 = vld [vmem:[%s8 + $0x1c8] sm:$0xff]
        %v1462 = vld [vmem:[%s8 + $0x1d0] sm:$0xff]
        %v1463 = vld [vmem:[%s8 + $0x1d8] sm:$0xff]
        %v1464 = vld [vmem:[%s8 + $0x1e0] sm:$0xff]
        %v1465 = vld [vmem:[%s8 + $0x1e8] sm:$0xff]
        %v1466 = vld [vmem:[%s8 + $0x1f0] sm:$0xff]
        %v1467 = vld [vmem:[%s8 + $0x1f8] sm:$0xff]
        %v1468 = vld [vmem:[%s8 + $0x200] sm:$0xff]
        %v1469 = vld [vmem:[%s8 + $0x208] sm:$0xff]
        %v1470 = vld [vmem:[%s8 + $0x210] sm:$0xff]
        %v1471 = vld [vmem:[%s8 + $0x218] sm:$0xff]
        %v1472 = vld [vmem:[%s8 + $0x220] sm:$0xff]
        %v1473 = vld [vmem:[%s8 + $0x228] sm:$0xff]
        %v1474 = vld [vmem:[%s8 + $0x230] sm:$0xff]
        %v1475 = vld [vmem:[%s8 + $0x238] sm:$0xff]
        %v1476 = vld [vmem:[%s8 + $0x240] sm:$0xff]
        %v1477 = vld [vmem:[%s8 + $0x248] sm:$0xff]
        %v1478 = vld [vmem:[%s8 + $0x250] sm:$0xff]
        %v1479 = vld [vmem:[%s8 + $0x258] sm:$0xff]
        %v1480 = vld [vmem:[%s8 + $0x260] sm:$0xff]
        %v1481 = vld [vmem:[%s8 + $0x268] sm:$0xff]
        %v1482 = vld [vmem:[%s8 + $0x270] sm:$0xff]
        %v1483 = vld [vmem:[%s8 + $0x278] sm:$0xff]
        %v1484 = vld [vmem:[%s8 + $0x280] sm:$0xff]
        %v1485 = vld [vmem:[%s8 + $0x288] sm:$0xff]
        %v1486 = vld [vmem:[%s8 + $0x290] sm:$0xff]
        %v1487 = vld [vmem:[%s8 + $0x298] sm:$0xff]
        %v1488 = vld [vmem:[%s8 + $0x2a0] sm:$0xff]
        %v1489 = vld [vmem:[%s8 + $0x2a8] sm:$0xff]
        %v1490 = vld [vmem:[%s8 + $0x2b0] sm:$0xff]
        %v1491 = vld [vmem:[%s8 + $0x2b8] sm:$0xff]
        %v1492 = vld [vmem:[%s8 + $0x2c0] sm:$0xff]
        %v1493 = vld [vmem:[%s8 + $0x2c8] sm:$0xff]
        %v1494 = vld [vmem:[%s8 + $0x2d0] sm:$0xff]
        %v1495 = vld [vmem:[%s8 + $0x2d8] sm:$0xff]
        %v1496 = vld [vmem:[%s8 + $0x2e0] sm:$0xff]
        %v1497 = vld [vmem:[%s8 + $0x2e8] sm:$0xff]
        %v1498 = vld [vmem:[%s8 + $0x2f0] sm:$0xff]
        %v1499 = vld [vmem:[%s8 + $0x2f8] sm:$0xff]
        %v1500 = vld [vmem:[%s8 + $0x300] sm:$0xff]
        %v1501 = vld [vmem:[%s8 + $0x308] sm:$0xff]
        %v1502 = vld [vmem:[%s8 + $0x310] sm:$0xff]
        %v1503 = vld [vmem:[%s8 + $0x318] sm:$0xff]
        %v1504 = vld [vmem:[%s8 + $0x320] sm:$0xff]
        %v1505 = vld [vmem:[%s8 + $0x328] sm:$0xff]
        %v1506 = vld [vmem:[%s8 + $0x330] sm:$0xff]
        %v1507 = vld [vmem:[%s8 + $0x338] sm:$0xff]
        %v1508 = vld [vmem:[%s8 + $0x340] sm:$0xff]
        %v1509 = vld [vmem:[%s8 + $0x348] sm:$0xff]
        %v1510 = vld [vmem:[%s8 + $0x350] sm:$0xff]
        %v1511 = vld [vmem:[%s8 + $0x358] sm:$0xff]
        %v1512 = vld [vmem:[%s8 + $0x360] sm:$0xff]
        %v1513 = vld [vmem:[%s8 + $0x368] sm:$0xff]
        %v1514 = vld [vmem:[%s8 + $0x370] sm:$0xff]
        %v1515 = vld [vmem:[%s8 + $0x378] sm:$0xff]
        %v1516 = vld [vmem:[%s8 + $0x380] sm:$0xff]
        %v1517 = vld [vmem:[%s8 + $0x388] sm:$0xff]
        %v1518 = vld [vmem:[%s8 + $0x390] sm:$0xff]
        %v1519 = vld [vmem:[%s8 + $0x398] sm:$0xff]
        %v1520 = vld [vmem:[%s8 + $0x3a0] sm:$0xff]
        %v1521 = vld [vmem:[%s8 + $0x3a8] sm:$0xff]
        %v1522 = vld [vmem:[%s8 + $0x3b0] sm:$0xff]
        %v1523 = vld [vmem:[%s8 + $0x3b8] sm:$0xff]
        %v1524 = vld [vmem:[%s8 + $0x3c0] sm:$0xff]
        %v1525 = vld [vmem:[%s8 + $0x3c8] sm:$0xff]
        %v1526 = vld [vmem:[%s8 + $0x3d0] sm:$0xff]
        %v1527 = vld [vmem:[%s8 + $0x3d8] sm:$0xff]
        %v1528 = vld [vmem:[%s8 + $0x3e0] sm:$0xff]
        %v1529 = vld [vmem:[%s8 + $0x3e8] sm:$0xff]
        %v1530 = vld [vmem:[%s8 + $0x3f0] sm:$0xff]
        %v1531 = vld [vmem:[%s8 + $0x3f8] sm:$0xff]
        %v1532 = vld [vmem:[%s9] sm:$0x1]
        %v1534 = vperm.slane %v1532, 0
        %1540 = vst [vmem:[#allocation1] ss:$2 sm:$0xff] %v1400
        %s1541 = scalar_lea.vmem [#allocation1], 16
        %1542 = vst [vmem:[%s1541] ss:$2 sm:$0xff] %v1401
        %s1543 = scalar_lea.vmem [#allocation1], 32
        %1544 = vst [vmem:[%s1543] ss:$2 sm:$0xff] %v1402
        %s1545 = scalar_lea.vmem [#allocation1], 48
        %1546 = vst [vmem:[%s1545] ss:$2 sm:$0xff] %v1403
        %v1547 = vld.sshfl [vmem:[#allocation1] sm:$0xff pattern:$0x75316420]
        %v1548 = vld.sshfl [vmem:[#allocation1 + $0x8] sm:$0xff pattern:$0x75316420]
        %v1549 = vld.sshfl [vmem:[#allocation1 + $0x10] sm:$0xff pattern:$0x75316420]
        %v1550 = vld.sshfl [vmem:[#allocation1 + $0x18] sm:$0xff pattern:$0x75316420]
        %v1551 = vld.sshfl [vmem:[#allocation1 + $0x20] sm:$0xff pattern:$0x75316420]
        %v1552 = vld.sshfl [vmem:[#allocation1 + $0x28] sm:$0xff pattern:$0x75316420]
        %v1553 = vld.sshfl [vmem:[#allocation1 + $0x30] sm:$0xff pattern:$0x75316420]
        %v1554 = vld.sshfl [vmem:[#allocation1 + $0x38] sm:$0xff pattern:$0x75316420]
        %1563 = vmatpush.msra.mxu0 %v1419
        %1564 = vmatpush.msra.mxu0 %v1418
        %1565 = vmatpush.msra.mxu0 %v1417
        %1566 = vmatpush.msra.mxu0 %v1416
        %1567 = vmatpush.msra.mxu0 %v1415
        %1568 = vmatpush.msra.mxu0 %v1414
        %1569 = vmatpush.msra.mxu0 %v1413
        %1570 = vmatpush.msra.mxu0 %v1412
        %1571 = vmatpush.msra.mxu0 %v1411
        %1572 = vmatpush.msra.mxu0 %v1410
        %1573 = vmatpush.msra.mxu0 %v1409
        %1574 = vmatpush.msra.mxu0 %v1408
        %1575 = vmatpush.msra.mxu0 %v1407
        %1576 = vmatpush.msra.mxu0 %v1406
        %1577 = vmatpush.msra.mxu0 %v1405
        %1578 = vmatpush.msra.mxu0 %v1404
        %1579 = vmatmul.f32.gmra.mxu0 %v1547
        %v1580 = vpop.f32.mrf.mxu0
        %v1581 = vadd.f32 %v1534, %v1580
        %1582 = vdwg.mxu0
        %1583 = vmatpush.msra.mxu0 %v1435
        %1584 = vmatpush.msra.mxu0 %v1434
        %1585 = vmatpush.msra.mxu0 %v1433
        %1586 = vmatpush.msra.mxu0 %v1432
        %1587 = vmatpush.msra.mxu0 %v1431
        %1588 = vmatpush.msra.mxu0 %v1430
        %1589 = vmatpush.msra.mxu0 %v1429
        %1590 = vmatpush.msra.mxu0 %v1428
        %1591 = vmatpush.msra.mxu0 %v1427
        %1592 = vmatpush.msra.mxu0 %v1426
        %1593 = vmatpush.msra.mxu0 %v1425
        %1594 = vmatpush.msra.mxu0 %v1424
        %1595 = vmatpush.msra.mxu0 %v1423
        %1596 = vmatpush.msra.mxu0 %v1422
        %1597 = vmatpush.msra.mxu0 %v1421
        %1598 = vmatpush.msra.mxu0 %v1420
        %1599 = vmatmul.f32.gmra.mxu0 %v1548
        %v1600 = vpop.f32.mrf.mxu0
        %v1601 = vadd.f32 %v1581, %v1600
        %1602 = vdwg.mxu0
        %1603 = vmatpush.msra.mxu0 %v1451
        %1604 = vmatpush.msra.mxu0 %v1450
        %1605 = vmatpush.msra.mxu0 %v1449
        %1606 = vmatpush.msra.mxu0 %v1448
        %1607 = vmatpush.msra.mxu0 %v1447
        %1608 = vmatpush.msra.mxu0 %v1446
        %1609 = vmatpush.msra.mxu0 %v1445
        %1610 = vmatpush.msra.mxu0 %v1444
        %1611 = vmatpush.msra.mxu0 %v1443
        %1612 = vmatpush.msra.mxu0 %v1442
        %1613 = vmatpush.msra.mxu0 %v1441
        %1614 = vmatpush.msra.mxu0 %v1440
        %1615 = vmatpush.msra.mxu0 %v1439
        %1616 = vmatpush.msra.mxu0 %v1438
        %1617 = vmatpush.msra.mxu0 %v1437
        %1618 = vmatpush.msra.mxu0 %v1436
        %1619 = vmatmul.f32.gmra.mxu0 %v1549
        %v1620 = vpop.f32.mrf.mxu0
        %v1621 = vadd.f32 %v1601, %v1620
        %1622 = vdwg.mxu0
        %1623 = vmatpush.msra.mxu0 %v1467
        %1624 = vmatpush.msra.mxu0 %v1466
        %1625 = vmatpush.msra.mxu0 %v1465
        %1626 = vmatpush.msra.mxu0 %v1464
        %1627 = vmatpush.msra.mxu0 %v1463
        %1628 = vmatpush.msra.mxu0 %v1462
        %1629 = vmatpush.msra.mxu0 %v1461
        %1630 = vmatpush.msra.mxu0 %v1460
        %1631 = vmatpush.msra.mxu0 %v1459
        %1632 = vmatpush.msra.mxu0 %v1458
        %1633 = vmatpush.msra.mxu0 %v1457
        %1634 = vmatpush.msra.mxu0 %v1456
        %1635 = vmatpush.msra.mxu0 %v1455
        %1636 = vmatpush.msra.mxu0 %v1454
        %1637 = vmatpush.msra.mxu0 %v1453
        %1638 = vmatpush.msra.mxu0 %v1452
        %1639 = vmatmul.f32.gmra.mxu0 %v1550
        %v1640 = vpop.f32.mrf.mxu0
        %v1641 = vadd.f32 %v1621, %v1640
        %1642 = vdwg.mxu0
        %1643 = vmatpush.msra.mxu0 %v1483
        %1644 = vmatpush.msra.mxu0 %v1482
        %1645 = vmatpush.msra.mxu0 %v1481
        %1646 = vmatpush.msra.mxu0 %v1480
        %1647 = vmatpush.msra.mxu0 %v1479
        %1648 = vmatpush.msra.mxu0 %v1478
        %1649 = vmatpush.msra.mxu0 %v1477
        %1650 = vmatpush.msra.mxu0 %v1476
        %1651 = vmatpush.msra.mxu0 %v1475
        %1652 = vmatpush.msra.mxu0 %v1474
        %1653 = vmatpush.msra.mxu0 %v1473
        %1654 = vmatpush.msra.mxu0 %v1472
        %1655 = vmatpush.msra.mxu0 %v1471
        %1656 = vmatpush.msra.mxu0 %v1470
        %1657 = vmatpush.msra.mxu0 %v1469
        %1658 = vmatpush.msra.mxu0 %v1468
        %1659 = vmatmul.f32.gmra.mxu0 %v1551
        %v1660 = vpop.f32.mrf.mxu0
        %v1661 = vadd.f32 %v1641, %v1660
        %1662 = vdwg.mxu0
        %1663 = vmatpush.msra.mxu0 %v1499
        %1664 = vmatpush.msra.mxu0 %v1498
        %1665 = vmatpush.msra.mxu0 %v1497
        %1666 = vmatpush.msra.mxu0 %v1496
        %1667 = vmatpush.msra.mxu0 %v1495
        %1668 = vmatpush.msra.mxu0 %v1494
        %1669 = vmatpush.msra.mxu0 %v1493
        %1670 = vmatpush.msra.mxu0 %v1492
        %1671 = vmatpush.msra.mxu0 %v1491
        %1672 = vmatpush.msra.mxu0 %v1490
        %1673 = vmatpush.msra.mxu0 %v1489
        %1674 = vmatpush.msra.mxu0 %v1488
        %1675 = vmatpush.msra.mxu0 %v1487
        %1676 = vmatpush.msra.mxu0 %v1486
        %1677 = vmatpush.msra.mxu0 %v1485
        %1678 = vmatpush.msra.mxu0 %v1484
        %1679 = vmatmul.f32.gmra.mxu0 %v1552
        %v1680 = vpop.f32.mrf.mxu0
        %v1681 = vadd.f32 %v1661, %v1680
        %1682 = vdwg.mxu0
        %1683 = vmatpush.msra.mxu0 %v1515
        %1684 = vmatpush.msra.mxu0 %v1514
        %1685 = vmatpush.msra.mxu0 %v1513
        %1686 = vmatpush.msra.mxu0 %v1512
        %1687 = vmatpush.msra.mxu0 %v1511
        %1688 = vmatpush.msra.mxu0 %v1510
        %1689 = vmatpush.msra.mxu0 %v1509
        %1690 = vmatpush.msra.mxu0 %v1508
        %1691 = vmatpush.msra.mxu0 %v1507
        %1692 = vmatpush.msra.mxu0 %v1506
        %1693 = vmatpush.msra.mxu0 %v1505
        %1694 = vmatpush.msra.mxu0 %v1504
        %1695 = vmatpush.msra.mxu0 %v1503
        %1696 = vmatpush.msra.mxu0 %v1502
        %1697 = vmatpush.msra.mxu0 %v1501
        %1698 = vmatpush.msra.mxu0 %v1500
        %1699 = vmatmul.f32.gmra.mxu0 %v1553
        %v1700 = vpop.f32.mrf.mxu0
        %v1701 = vadd.f32 %v1681, %v1700
        %1702 = vdwg.mxu0
        %1703 = vmatpush.msra.mxu0 %v1531
        %1704 = vmatpush.msra.mxu0 %v1530
        %1705 = vmatpush.msra.mxu0 %v1529
        %1706 = vmatpush.msra.mxu0 %v1528
        %1707 = vmatpush.msra.mxu0 %v1527
        %1708 = vmatpush.msra.mxu0 %v1526
        %1709 = vmatpush.msra.mxu0 %v1525
        %1710 = vmatpush.msra.mxu0 %v1524
        %1711 = vmatpush.msra.mxu0 %v1523
        %1712 = vmatpush.msra.mxu0 %v1522
        %1713 = vmatpush.msra.mxu0 %v1521
        %1714 = vmatpush.msra.mxu0 %v1520
        %1715 = vmatpush.msra.mxu0 %v1519
        %1716 = vmatpush.msra.mxu0 %v1518
        %1717 = vmatpush.msra.mxu0 %v1517
        %1718 = vmatpush.msra.mxu0 %v1516
        %1719 = vmatmul.f32.gmra.mxu0 %v1554
        %v1720 = vpop.f32.mrf.mxu0
        %v1721 = vadd.f32 %v1701, %v1720
        %1722 = vdwg.mxu0
        %v1723 = vmax.f32 %v1721, 0.0
        %vm1724 = vcmask 257024
        %1725 = vst.msk [vmem:[%s469] sm:$0xf] %vm1724, %v1723
        %v1726 = vld [vmem:[%s10] sm:$0xff]
        %v1727 = vld [vmem:[%s10 + $0x8] sm:$0xff]
        %v1728 = vld [vmem:[%s10 + $0x10] sm:$0xff]
        %v1729 = vld [vmem:[%s10 + $0x18] sm:$0xff]
        %v1730 = vld [vmem:[%s11] sm:$0x1]
        %v1732 = vperm.slane %v1730, 0
        %vm1734 = vcmask 261120
        %v1736 = vsel %vm1734, %v1723, 0
        %1738 = vmatpush.msra.mxu0 0.0
        %1739 = vmatpush.msra.mxu0 0.0
        %1740 = vmatpush.msra.mxu0 0.0
        %1741 = vmatpush.msra.mxu0 0.0
        %1742 = vmatpush.msra.mxu0 0.0
        %1743 = vmatpush.msra.mxu0 0.0
        %1744 = vmatpush.msra.mxu0 0.0
        %1745 = vmatpush.msra.mxu0 0.0
        %1746 = vmatpush.msra.mxu0 0.0
        %1747 = vmatpush.msra.mxu0 0.0
        %1748 = vmatpush.msra.mxu0 0.0
        %1749 = vmatpush.msra.mxu0 0.0
        %1750 = vmatpush.msra.mxu0 %v1729
        %1751 = vmatpush.msra.mxu0 %v1728
        %1752 = vmatpush.msra.mxu0 %v1727
        %1753 = vmatpush.msra.mxu0 %v1726
        %1754 = vmatmul.f32.gmra.mxu0 %v1736
        %v1755 = vpop.f32.mrf.mxu0
        %v1756 = vadd.f32 %v1732, %v1755
        %1757 = vdwg.mxu0
        %v1758 = vsub.f32 0.0, %v1756
        %v1759 = vmul.f32 %v1758, 1.442695
        %v1760 = vpow.pop %v1759
        %v1761 = vadd.f32 %v1760, 1.0
        %v1762 = vrcp.pop %v1761
        %v1763 = vmul.f32 %v1761, %v1762
        %v1764 = vsub.f32 1.0, %v1763
        %v1765 = vmul.f32 %v1762, %v1764
        %v1766 = vadd.f32 %v1762, %v1765
        %vm1767 = vweird.f32 %v1761
        %vm1768 = vweird.f32 %v1762
        %vm1769 = vmor %vm1767, %vm1768
        %v1770 = vsel %vm1769, %v1762, %v1766
        %v1771 = vand.u32 2147483647, %v1761
        %vm1772 = vcmp.eq.f32.partialorder %v1771, 8.507059e+37
        %v1773 = vand.u32 %v1761, 2147483648
        %v1774 = vor.u32 1.1754944e-38, %v1773
        %v1775 = vsel %vm1772, %v1774, %v1770
        %v1776 = vmul.f32 1.0, %v1775
        %vm1777 = vcmask 11264
        %1778 = vst.msk [vmem:[%s490] sm:$0xf] %vm1777, %v1776
        %p1779 = scmp.lt.s32.totalorder %s29, 1
        %s1780 = scalar_select %p1779, %s29, 1
        %s1781 = smul.addr %s1780, 8
        %s1782 = smul.addr %s1781, 4
        %s1783 = scalar_lea.vmem %s12, %s1782
        %s1784 = sand.u32 %s320, 1
        %s1785 = scalar_lea.sflag [#allocation4], %s1784
        %s1786 = sand.u32 %s320, 1
        %s1787 = smul.addr %s1786, 4
        %s1788 = scalar_lea.vmem [#allocation3], %s1787
        %p1789 = scmp.lt.s32.totalorder %s29, 1
        %s1790 = scalar_select %p1789, %s29, 1
        %s1791 = smul.addr %s1790, 4
        %s1792 = scalar_lea.vmem %s14, %s1791
        // Predicated region
        $region69: #{side_layer_forward.1} parent=67 // pred_check
          %p1793 = pneg %p304
        $region70: #{side_layer_forward.1} parent=67 // pred_check_branch
          %1795 = sbr.rel (%p1793) target = $region72
        $region71: #{side_layer_forward.1} parent=67 // pred_region
          _
        $region72: #{side_layer_forward.1} parent=67 // pred_fallthru
          _
        // Predicated region
        $region73: #{side_layer_forward.1} parent=67 // pred_check
          %p1796 = pneg %p330
        $region74: #{side_layer_forward.1} parent=67 // pred_check_branch
          %1798 = sbr.rel (%p1796) target = $region76
        $region75: #{side_layer_forward.1} parent=67 // pred_region
          %1800 = vsyncadd %s1785, 0
          %s1801 = smul.addr %s29, 4
          %s1802 = scalar_lea.hbm %s13, %s1801
          %s1804 = sshll.u32 %s1788, 4
          %s1805 = int_to_ptr.vmem [resolvable:$true] %s1804
          %s1806 = sshll.u32 %s1802, 4
          %s1807 = int_to_ptr.hbm [resolvable:$true] %s1806
          %1809 = dma.vmem_to_hbm [thread:$0]  %s1805, 64, %s1807, %s1785
        $region76: #{side_layer_forward.1} parent=67 // pred_fallthru
          _
        // Predicated region
        $region77: #{side_layer_forward.1} parent=67 // pred_check
          %p1810 = pneg %p356
        $region78: #{side_layer_forward.1} parent=67 // pred_check_branch
          %1812 = sbr.rel (%p1810) target = $region80
        $region79: #{side_layer_forward.1} parent=67 // pred_region
          _
        $region80: #{side_layer_forward.1} parent=67 // pred_fallthru
          _
      $region68: #{side_layer_forward.1} parent=5 // pred_fallthru
        _
      %p1813 = scmp.le.s32.totalorder 2, %s24
      // Predicated region
      $region81: #{side_layer_forward.1} parent=5 // pred_check
        %p1814 = pneg %p1813
      $region82: #{side_layer_forward.1} parent=5 // pred_check_branch
        %1816 = sbr.rel (%p1814) target = $region84
      $region83: #{side_layer_forward.1} parent=5 // pred_region
        %s1817 = ssub.s32 %s24, 2
        // Predicated region
        $region85: #{side_layer_forward.1} parent=83 // pred_check
          %p1818 = pneg %p310
        $region86: #{side_layer_forward.1} parent=83 // pred_check_branch
          %1820 = sbr.rel (%p1818) target = $region88
        $region87: #{side_layer_forward.1} parent=83 // pred_region
          %p1821 = scmp.lt.s32.totalorder %s30, 1
          %s1822 = scalar_select %p1821, %s30, 1
          %s1823 = smul.addr %s1822, 8
          %s1824 = smul.addr %s1823, 4
          %s1825 = scalar_lea.vmem %s12, %s1824
        $region88: #{side_layer_forward.1} parent=83 // pred_fallthru
          _
        // Predicated region
        $region89: #{side_layer_forward.1} parent=83 // pred_check
          %p1826 = pneg %p336
        $region90: #{side_layer_forward.1} parent=83 // pred_check_branch
          %1828 = sbr.rel (%p1826) target = $region92
        $region91: #{side_layer_forward.1} parent=83 // pred_region
          %s1829 = sand.u32 %s321, 1
          %s1830 = scalar_lea.sflag [#allocation4], %s1829
          %s1831 = sand.u32 %s321, 1
          %s1832 = smul.addr %s1831, 4
          %s1833 = scalar_lea.vmem [#allocation3], %s1832
          %1835 = dma.done %s1830, 64
        $region92: #{side_layer_forward.1} parent=83 // pred_fallthru
          _
        // Predicated region
        $region93: #{side_layer_forward.1} parent=83 // pred_check
          %p1836 = pneg %p362
        $region94: #{side_layer_forward.1} parent=83 // pred_check_branch
          %1838 = sbr.rel (%p1836) target = $region96
        $region95: #{side_layer_forward.1} parent=83 // pred_region
          %p1839 = scmp.lt.s32.totalorder %s30, 1
          %s1840 = scalar_select %p1839, %s30, 1
          %s1841 = smul.addr %s1840, 4
          %s1842 = scalar_lea.vmem %s14, %s1841
        $region96: #{side_layer_forward.1} parent=83 // pred_fallthru
          _
      $region84: #{side_layer_forward.1} parent=5 // pred_fallthru
        _
    $region6: #{side_layer_forward.1} parent=1 // loop_footer
      %s28 = sadd.s32 1, %s24
    $region7: #{side_layer_forward.1} parent=1 // loop_footer_branch
      %23 = sbr.rel target = $region3
    $region8: #{side_layer_forward.1} parent=1 // loop_exit
      _
    %1843 = vsyncpa [#allocation4], 1
    %s1844 = scalar_lea.sflag [#allocation4], 1
    %1845 = vsyncpa %s1844, 1

</llo_original>
